<compile_context>
chip_gen: v6e
topology: v6e:2x2x1
jax: 0.10.0
libtpu: 0.0.40
codegen_flags: <defaults>
</compile_context>

<pallas_src>
import functools
import math

import jax
import jax.numpy as jnp
from jax.experimental import pallas as pl
from jax.experimental.pallas import tpu as pltpu


# ----------------------------------------------------------------------------
# Fused kernel: local phi + local gated-attention pooling (per bag),
#               global phi + global gated-attention pooling (over bags),
#               global rho, classifier, softmax probs.
# ----------------------------------------------------------------------------
def fused_kernel(h_ref, wphi_ref, bphi_ref, wla_ref, bla_ref, wlb_ref, blb_ref,
                 wlc_ref, blc_ref, wg_ref, bg_ref, wga_ref, bga_ref, wgb_ref,
                 bgb_ref, wgc_ref, bgc_ref, wr_ref, br_ref, wcls_ref, bcls_ref,
                 logits_ref, prob_ref, *, B, N):
    # ------------------ Stage 1: local (bags folded into M) ------------------
    x = h_ref[...]                                            # (B*N, P)
    h256 = jnp.maximum(
        jnp.dot(x, wphi_ref[...], preferred_element_type=jnp.float32)
        + bphi_ref[...], 0.0)                                 # (B*N, D)  local_phi
    a = jnp.tanh(
        jnp.dot(h256, wla_ref[...], preferred_element_type=jnp.float32)
        + bla_ref[...])
    b = jax.nn.sigmoid(
        jnp.dot(h256, wlb_ref[...], preferred_element_type=jnp.float32)
        + blb_ref[...])
    gated = (a * b).reshape(B, N, -1)                         # (B, N, D)
    # D -> 1 projection as a lane reduction (VPU/XLU), not a 1-wide matmul.
    s = jnp.sum(gated * wlc_ref[...], axis=-1, keepdims=True) \
        + blc_ref[...]                                        # (B, N, 1)
    # softmax over the N patches of each bag
    s = s - jnp.max(s, axis=1, keepdims=True)
    e = jnp.exp(s)
    w = e / jnp.sum(e, axis=1, keepdims=True)                 # (B, N, 1)
    h3 = h256.reshape(B, N, -1)                               # (B, N, D)
    h4096 = jnp.sum(w * h3, axis=1)                           # (B, D) = A^T h256

    # ------------------ Stage 2: global pooling over bags --------------------
    hg = jnp.maximum(
        jnp.dot(h4096, wg_ref[...], preferred_element_type=jnp.float32)
        + bg_ref[...], 0.0)                                   # global_phi
    a2 = jnp.tanh(
        jnp.dot(hg, wga_ref[...], preferred_element_type=jnp.float32)
        + bga_ref[...])
    b2 = jax.nn.sigmoid(
        jnp.dot(hg, wgb_ref[...], preferred_element_type=jnp.float32)
        + bgb_ref[...])
    s2 = jnp.sum((a2 * b2) * wgc_ref[...], axis=-1, keepdims=True) \
        + bgc_ref[...]                                        # (B, 1)
    # transpose -> (1, B), softmax over B  == softmax over axis 0 here
    s2 = s2 - jnp.max(s2, axis=0, keepdims=True)
    e2 = jnp.exp(s2)
    w2 = e2 / jnp.sum(e2, axis=0, keepdims=True)              # (B, 1)
    h_path = jnp.sum(w2 * hg, axis=0, keepdims=True)          # (1, D) = A hg
    h_path = jnp.maximum(
        jnp.dot(h_path, wr_ref[...], preferred_element_type=jnp.float32)
        + br_ref[...], 0.0)                                   # global_rho
    logits = jnp.dot(h_path, wcls_ref[...], preferred_element_type=jnp.float32) \
        + bcls_ref[...]                                       # (1, C)
    logits_ref[...] = logits
    m = jnp.max(logits, axis=1, keepdims=True)
    ee = jnp.exp(logits - m)
    prob_ref[...] = ee / jnp.sum(ee, axis=1, keepdims=True)


# ----------------------------------------------------------------------------
# Wrapper
# ----------------------------------------------------------------------------
def hipt_none_fc_forward(h, p):
    B, N, P = h.shape
    C = p["wcls"].shape[1]
    h2d = h.reshape(B * N, P)                                  # fold bags into M
    kernel = functools.partial(fused_kernel, B=B, N=N)
    logits, y_prob = pl.pallas_call(
        kernel,
        out_shape=(jax.ShapeDtypeStruct((1, C), jnp.float32),
                   jax.ShapeDtypeStruct((1, C), jnp.float32)),
    )(h2d,
      p["wphi"], p["bphi"],
      p["wla"], p["bla"], p["wlb"], p["blb"],
      p["wlc"].reshape(1, -1), p["blc"],
      p["wg"], p["bg"],
      p["wga"], p["bga"], p["wgb"], p["bgb"],
      p["wgc"].reshape(1, -1), p["bgc"],
      p["wr"], p["br"], p["wcls"], p["bcls"])
    y_hat = jnp.argmax(logits, axis=1, keepdims=True)          # torch.topk(...,1)[1]
    return logits, y_prob, y_hat


# ----------------------------------------------------------------------------
# Deterministic parameter init (PyTorch nn.Linear-style uniform bounds),
# weights stored as (in, out) so forward is x @ W + b.
# ----------------------------------------------------------------------------
def linear_params(key, fan_in, fan_out):
    kw, kb = jax.random.split(key)
    bound = 1.0 / math.sqrt(fan_in)
    w = jax.random.uniform(kw, (fan_in, fan_out), jnp.float32, -bound, bound)
    b = jax.random.uniform(kb, (1, fan_out), jnp.float32, -bound, bound)
    return w, b


def init_params(key, path_input_dim=768, hidden=256, n_classes=2):
    keys = jax.random.split(key, 10)
    p = {}
    p["wphi"], p["bphi"] = linear_params(keys[0], path_input_dim, hidden)
    p["wla"], p["bla"] = linear_params(keys[1], hidden, hidden)
    p["wlb"], p["blb"] = linear_params(keys[2], hidden, hidden)
    p["wlc"], p["blc"] = linear_params(keys[3], hidden, 1)
    p["wg"], p["bg"] = linear_params(keys[4], hidden, hidden)
    p["wga"], p["bga"] = linear_params(keys[5], hidden, hidden)
    p["wgb"], p["bgb"] = linear_params(keys[6], hidden, hidden)
    p["wgc"], p["bgc"] = linear_params(keys[7], hidden, 1)
    p["wr"], p["br"] = linear_params(keys[8], hidden, hidden)
    p["wcls"], p["bcls"] = linear_params(keys[9], hidden, n_classes)
    return p


# ----------------------------------------------------------------------------
# Pure-JAX reference (eval mode, dropout = identity) for a sanity check.
# ----------------------------------------------------------------------------
def ref_forward(h, p):
    h256 = jax.nn.relu(h @ p["wphi"] + p["bphi"])              # (B,N,D)
    a = jnp.tanh(h256 @ p["wla"] + p["bla"])
    b = jax.nn.sigmoid(h256 @ p["wlb"] + p["blb"])
    A = (a * b) @ p["wlc"] + p["blc"]                          # (B,N,1)
    A = jax.nn.softmax(A[..., 0], axis=1)                      # (B,N)
    h4096 = jnp.einsum("bn,bnd->bd", A, h256)                  # (B,D)
    hg = jax.nn.relu(h4096 @ p["wg"] + p["bg"])
    a = jnp.tanh(hg @ p["wga"] + p["bga"])
    b = jax.nn.sigmoid(hg @ p["wgb"] + p["bgb"])
    A = (a * b) @ p["wgc"] + p["bgc"]                          # (B,1)
    A = jax.nn.softmax(A.T, axis=1)                            # (1,B)
    h_path = A @ hg                                            # (1,D)
    h_path = jax.nn.relu(h_path @ p["wr"] + p["br"])
    logits = h_path @ p["wcls"] + p["bcls"]                    # (1,C)
    return logits, jax.nn.softmax(logits, axis=1)


if __name__ == "__main__":
    B, N, P, D, C = 2, 8, 768, 256, 2
    key = jax.random.PRNGKey(0)
    kx, kp = jax.random.split(key)
    h = jax.random.normal(kx, (B, N, P), jnp.float32)
    params = init_params(kp, path_input_dim=P, hidden=D, n_classes=C)

    logits, y_prob, y_hat = hipt_none_fc_forward(h, params)
    jax.block_until_ready((logits, y_prob, y_hat))

    ref_logits, ref_prob = ref_forward(h, params)
    assert jnp.allclose(logits, ref_logits, rtol=1e-3, atol=1e-3), "logits mismatch"
    assert jnp.allclose(y_prob, ref_prob, rtol=1e-3, atol=1e-3), "probs mismatch"
    assert y_hat.shape == (1, 1)

    print("KERNEL_OK")
</pallas_src>

<mosaic_0001>
module attributes {stable_mosaic.version = 11 : i64} {
  func.func @fused_kernel(%arg0: memref<16x768xf32, #tpu.memory_space<vmem>>, %arg1: memref<768x256xf32, #tpu.memory_space<vmem>>, %arg2: memref<1x256xf32, #tpu.memory_space<vmem>>, %arg3: memref<256x256xf32, #tpu.memory_space<vmem>>, %arg4: memref<1x256xf32, #tpu.memory_space<vmem>>, %arg5: memref<256x256xf32, #tpu.memory_space<vmem>>, %arg6: memref<1x256xf32, #tpu.memory_space<vmem>>, %arg7: memref<1x256xf32, #tpu.memory_space<vmem>>, %arg8: memref<1x1xf32, #tpu.memory_space<vmem>>, %arg9: memref<256x256xf32, #tpu.memory_space<vmem>>, %arg10: memref<1x256xf32, #tpu.memory_space<vmem>>, %arg11: memref<256x256xf32, #tpu.memory_space<vmem>>, %arg12: memref<1x256xf32, #tpu.memory_space<vmem>>, %arg13: memref<256x256xf32, #tpu.memory_space<vmem>>, %arg14: memref<1x256xf32, #tpu.memory_space<vmem>>, %arg15: memref<1x256xf32, #tpu.memory_space<vmem>>, %arg16: memref<1x1xf32, #tpu.memory_space<vmem>>, %arg17: memref<256x256xf32, #tpu.memory_space<vmem>>, %arg18: memref<1x256xf32, #tpu.memory_space<vmem>>, %arg19: memref<256x2xf32, #tpu.memory_space<vmem>>, %arg20: memref<1x2xf32, #tpu.memory_space<vmem>>, %arg21: memref<1x2xf32, #tpu.memory_space<vmem>>, %arg22: memref<1x2xf32, #tpu.memory_space<vmem>>) attributes {dimension_semantics = [], scalar_prefetch = 0 : i64, scratch_operands = 0 : i64, tpu.core_type = #tpu.core_type<tc>} {
    %c0 = arith.constant 0 : index
    %c0_0 = arith.constant 0 : index
    %0 = vector.load %arg0[%c0, %c0_0] : memref<16x768xf32, #tpu.memory_space<vmem>>, vector<16x768xf32>
    %c0_1 = arith.constant 0 : index
    %c0_2 = arith.constant 0 : index
    %1 = vector.load %arg1[%c0_1, %c0_2] : memref<768x256xf32, #tpu.memory_space<vmem>>, vector<768x256xf32>
    %cst = arith.constant dense<0.000000e+00> : vector<16x256xf32>
    %2 = tpu.matmul %0, %1, %cst {dimension_numbers = #tpu.dot_dimension_numbers<[1], [0], [0], [1], [0, 0, 1, 1], [], []>} : vector<16x768xf32>, vector<768x256xf32>, vector<16x256xf32> -> vector<16x256xf32>
    %c0_3 = arith.constant 0 : index
    %c0_4 = arith.constant 0 : index
    %3 = vector.load %arg2[%c0_3, %c0_4] : memref<1x256xf32, #tpu.memory_space<vmem>>, vector<1x256xf32>
    %4 = vector.broadcast %3 : vector<1x256xf32> to vector<16x256xf32>
    %5 = arith.addf %2, %4 : vector<16x256xf32>
    %cst_5 = arith.constant 0.000000e+00 : f32
    %6 = vector.broadcast %cst_5 : f32 to vector<16x256xf32>
    %7 = arith.maximumf %5, %6 : vector<16x256xf32>
    %c0_6 = arith.constant 0 : index
    %c0_7 = arith.constant 0 : index
    %8 = vector.load %arg3[%c0_6, %c0_7] : memref<256x256xf32, #tpu.memory_space<vmem>>, vector<256x256xf32>
    %cst_8 = arith.constant dense<0.000000e+00> : vector<16x256xf32>
    %9 = tpu.matmul %7, %8, %cst_8 {dimension_numbers = #tpu.dot_dimension_numbers<[1], [0], [0], [1], [0, 0, 1, 1], [], []>} : vector<16x256xf32>, vector<256x256xf32>, vector<16x256xf32> -> vector<16x256xf32>
    %c0_9 = arith.constant 0 : index
    %c0_10 = arith.constant 0 : index
    %10 = vector.load %arg4[%c0_9, %c0_10] : memref<1x256xf32, #tpu.memory_space<vmem>>, vector<1x256xf32>
    %11 = vector.broadcast %10 : vector<1x256xf32> to vector<16x256xf32>
    %12 = arith.addf %9, %11 : vector<16x256xf32>
    %13 = math.tanh %12 : vector<16x256xf32>
    %c0_11 = arith.constant 0 : index
    %c0_12 = arith.constant 0 : index
    %14 = vector.load %arg5[%c0_11, %c0_12] : memref<256x256xf32, #tpu.memory_space<vmem>>, vector<256x256xf32>
    %cst_13 = arith.constant dense<0.000000e+00> : vector<16x256xf32>
    %15 = tpu.matmul %7, %14, %cst_13 {dimension_numbers = #tpu.dot_dimension_numbers<[1], [0], [0], [1], [0, 0, 1, 1], [], []>} : vector<16x256xf32>, vector<256x256xf32>, vector<16x256xf32> -> vector<16x256xf32>
    %c0_14 = arith.constant 0 : index
    %c0_15 = arith.constant 0 : index
    %16 = vector.load %arg6[%c0_14, %c0_15] : memref<1x256xf32, #tpu.memory_space<vmem>>, vector<1x256xf32>
    %17 = vector.broadcast %16 : vector<1x256xf32> to vector<16x256xf32>
    %18 = arith.addf %15, %17 : vector<16x256xf32>
    %19 = arith.negf %18 : vector<16x256xf32>
    %20 = math.exp %19 : vector<16x256xf32>
    %cst_16 = arith.constant 1.000000e+00 : f32
    %21 = vector.broadcast %cst_16 : f32 to vector<16x256xf32>
    %22 = arith.addf %21, %20 : vector<16x256xf32>
    %23 = arith.divf %21, %22 : vector<16x256xf32>
    %24 = arith.mulf %13, %23 : vector<16x256xf32>
    %25 = vector.shape_cast %24 : vector<16x256xf32> to vector<2x8x256xf32>
    %c0_17 = arith.constant 0 : index
    %c0_18 = arith.constant 0 : index
    %26 = vector.load %arg7[%c0_17, %c0_18] : memref<1x256xf32, #tpu.memory_space<vmem>>, vector<1x256xf32>
    %27 = vector.shape_cast %26 : vector<1x256xf32> to vector<1x1x256xf32>
    %28 = vector.broadcast %27 : vector<1x1x256xf32> to vector<2x8x256xf32>
    %29 = arith.mulf %25, %28 : vector<2x8x256xf32>
    %cst_19 = arith.constant dense<0.000000e+00> : vector<2x8xf32>
    %30 = vector.multi_reduction <add>, %29, %cst_19 [2] : vector<2x8x256xf32> to vector<2x8xf32>
    %31 = vector.shape_cast %30 : vector<2x8xf32> to vector<2x8x1xf32>
    %c0_20 = arith.constant 0 : index
    %c0_21 = arith.constant 0 : index
    %32 = vector.load %arg8[%c0_20, %c0_21] : memref<1x1xf32, #tpu.memory_space<vmem>>, vector<1x1xf32>
    %33 = vector.shape_cast %32 : vector<1x1xf32> to vector<1x1x1xf32>
    %34 = vector.broadcast %33 : vector<1x1x1xf32> to vector<2x8x1xf32>
    %35 = arith.addf %31, %34 : vector<2x8x1xf32>
    %cst_22 = arith.constant dense<0xFF800000> : vector<2x1xf32>
    %36 = vector.multi_reduction <maximumf>, %35, %cst_22 [1] : vector<2x8x1xf32> to vector<2x1xf32>
    %37 = vector.shape_cast %36 : vector<2x1xf32> to vector<2x1x1xf32>
    %38 = vector.broadcast %37 : vector<2x1x1xf32> to vector<2x8x1xf32>
    %39 = arith.subf %35, %38 : vector<2x8x1xf32>
    %40 = math.exp %39 : vector<2x8x1xf32>
    %cst_23 = arith.constant dense<0.000000e+00> : vector<2x1xf32>
    %41 = vector.multi_reduction <add>, %40, %cst_23 [1] : vector<2x8x1xf32> to vector<2x1xf32>
    %42 = vector.shape_cast %41 : vector<2x1xf32> to vector<2x1x1xf32>
    %43 = vector.broadcast %42 : vector<2x1x1xf32> to vector<2x8x1xf32>
    %44 = arith.divf %40, %43 : vector<2x8x1xf32>
    %45 = vector.shape_cast %7 : vector<16x256xf32> to vector<2x8x256xf32>
    %46 = vector.broadcast %44 : vector<2x8x1xf32> to vector<2x8x256xf32>
    %47 = arith.mulf %46, %45 : vector<2x8x256xf32>
    %cst_24 = arith.constant dense<0.000000e+00> : vector<2x256xf32>
    %48 = vector.multi_reduction <add>, %47, %cst_24 [1] : vector<2x8x256xf32> to vector<2x256xf32>
    %c0_25 = arith.constant 0 : index
    %c0_26 = arith.constant 0 : index
    %49 = vector.load %arg9[%c0_25, %c0_26] : memref<256x256xf32, #tpu.memory_space<vmem>>, vector<256x256xf32>
    %cst_27 = arith.constant dense<0.000000e+00> : vector<2x256xf32>
    %50 = tpu.matmul %48, %49, %cst_27 {dimension_numbers = #tpu.dot_dimension_numbers<[1], [0], [0], [1], [0, 0, 1, 1], [], []>} : vector<2x256xf32>, vector<256x256xf32>, vector<2x256xf32> -> vector<2x256xf32>
    %c0_28 = arith.constant 0 : index
    %c0_29 = arith.constant 0 : index
    %51 = vector.load %arg10[%c0_28, %c0_29] : memref<1x256xf32, #tpu.memory_space<vmem>>, vector<1x256xf32>
    %52 = vector.broadcast %51 : vector<1x256xf32> to vector<2x256xf32>
    %53 = arith.addf %50, %52 : vector<2x256xf32>
    %cst_30 = arith.constant 0.000000e+00 : f32
    %54 = vector.broadcast %cst_30 : f32 to vector<2x256xf32>
    %55 = arith.maximumf %53, %54 : vector<2x256xf32>
    %c0_31 = arith.constant 0 : index
    %c0_32 = arith.constant 0 : index
    %56 = vector.load %arg11[%c0_31, %c0_32] : memref<256x256xf32, #tpu.memory_space<vmem>>, vector<256x256xf32>
    %cst_33 = arith.constant dense<0.000000e+00> : vector<2x256xf32>
    %57 = tpu.matmul %55, %56, %cst_33 {dimension_numbers = #tpu.dot_dimension_numbers<[1], [0], [0], [1], [0, 0, 1, 1], [], []>} : vector<2x256xf32>, vector<256x256xf32>, vector<2x256xf32> -> vector<2x256xf32>
    %c0_34 = arith.constant 0 : index
    %c0_35 = arith.constant 0 : index
    %58 = vector.load %arg12[%c0_34, %c0_35] : memref<1x256xf32, #tpu.memory_space<vmem>>, vector<1x256xf32>
    %59 = vector.broadcast %58 : vector<1x256xf32> to vector<2x256xf32>
    %60 = arith.addf %57, %59 : vector<2x256xf32>
    %61 = math.tanh %60 : vector<2x256xf32>
    %c0_36 = arith.constant 0 : index
    %c0_37 = arith.constant 0 : index
    %62 = vector.load %arg13[%c0_36, %c0_37] : memref<256x256xf32, #tpu.memory_space<vmem>>, vector<256x256xf32>
    %cst_38 = arith.constant dense<0.000000e+00> : vector<2x256xf32>
    %63 = tpu.matmul %55, %62, %cst_38 {dimension_numbers = #tpu.dot_dimension_numbers<[1], [0], [0], [1], [0, 0, 1, 1], [], []>} : vector<2x256xf32>, vector<256x256xf32>, vector<2x256xf32> -> vector<2x256xf32>
    %c0_39 = arith.constant 0 : index
    %c0_40 = arith.constant 0 : index
    %64 = vector.load %arg14[%c0_39, %c0_40] : memref<1x256xf32, #tpu.memory_space<vmem>>, vector<1x256xf32>
    %65 = vector.broadcast %64 : vector<1x256xf32> to vector<2x256xf32>
    %66 = arith.addf %63, %65 : vector<2x256xf32>
    %67 = arith.negf %66 : vector<2x256xf32>
    %68 = math.exp %67 : vector<2x256xf32>
    %cst_41 = arith.constant 1.000000e+00 : f32
    %69 = vector.broadcast %cst_41 : f32 to vector<2x256xf32>
    %70 = arith.addf %69, %68 : vector<2x256xf32>
    %71 = arith.divf %69, %70 : vector<2x256xf32>
    %72 = arith.mulf %61, %71 : vector<2x256xf32>
    %c0_42 = arith.constant 0 : index
    %c0_43 = arith.constant 0 : index
    %73 = vector.load %arg15[%c0_42, %c0_43] : memref<1x256xf32, #tpu.memory_space<vmem>>, vector<1x256xf32>
    %74 = vector.broadcast %73 : vector<1x256xf32> to vector<2x256xf32>
    %75 = arith.mulf %72, %74 : vector<2x256xf32>
    %cst_44 = arith.constant dense<0.000000e+00> : vector<2xf32>
    %76 = vector.multi_reduction <add>, %75, %cst_44 [1] : vector<2x256xf32> to vector<2xf32>
    %77 = vector.shape_cast %76 : vector<2xf32> to vector<2x1xf32>
    %c0_45 = arith.constant 0 : index
    %c0_46 = arith.constant 0 : index
    %78 = vector.load %arg16[%c0_45, %c0_46] : memref<1x1xf32, #tpu.memory_space<vmem>>, vector<1x1xf32>
    %79 = vector.broadcast %78 : vector<1x1xf32> to vector<2x1xf32>
    %80 = arith.addf %77, %79 : vector<2x1xf32>
    %cst_47 = arith.constant dense<0xFF800000> : vector<1xf32>
    %81 = vector.multi_reduction <maximumf>, %80, %cst_47 [0] : vector<2x1xf32> to vector<1xf32>
    %82 = vector.shape_cast %81 : vector<1xf32> to vector<1x1xf32>
    %83 = vector.broadcast %82 : vector<1x1xf32> to vector<2x1xf32>
    %84 = arith.subf %80, %83 : vector<2x1xf32>
    %85 = math.exp %84 : vector<2x1xf32>
    %cst_48 = arith.constant dense<0.000000e+00> : vector<1xf32>
    %86 = vector.multi_reduction <add>, %85, %cst_48 [0] : vector<2x1xf32> to vector<1xf32>
    %87 = vector.shape_cast %86 : vector<1xf32> to vector<1x1xf32>
    %88 = vector.broadcast %87 : vector<1x1xf32> to vector<2x1xf32>
    %89 = arith.divf %85, %88 : vector<2x1xf32>
    %90 = vector.broadcast %89 : vector<2x1xf32> to vector<2x256xf32>
    %91 = arith.mulf %90, %55 : vector<2x256xf32>
    %cst_49 = arith.constant dense<0.000000e+00> : vector<256xf32>
    %92 = vector.multi_reduction <add>, %91, %cst_49 [0] : vector<2x256xf32> to vector<256xf32>
    %93 = vector.shape_cast %92 : vector<256xf32> to vector<1x256xf32>
    %c0_50 = arith.constant 0 : index
    %c0_51 = arith.constant 0 : index
    %94 = vector.load %arg17[%c0_50, %c0_51] : memref<256x256xf32, #tpu.memory_space<vmem>>, vector<256x256xf32>
    %cst_52 = arith.constant dense<0.000000e+00> : vector<1x256xf32>
    %95 = tpu.matmul %93, %94, %cst_52 {dimension_numbers = #tpu.dot_dimension_numbers<[1], [0], [0], [1], [0, 0, 1, 1], [], []>} : vector<1x256xf32>, vector<256x256xf32>, vector<1x256xf32> -> vector<1x256xf32>
    %c0_53 = arith.constant 0 : index
    %c0_54 = arith.constant 0 : index
    %96 = vector.load %arg18[%c0_53, %c0_54] : memref<1x256xf32, #tpu.memory_space<vmem>>, vector<1x256xf32>
    %97 = arith.addf %95, %96 : vector<1x256xf32>
    %cst_55 = arith.constant 0.000000e+00 : f32
    %98 = vector.broadcast %cst_55 : f32 to vector<1x256xf32>
    %99 = arith.maximumf %97, %98 : vector<1x256xf32>
    %c0_56 = arith.constant 0 : index
    %c0_57 = arith.constant 0 : index
    %100 = vector.load %arg19[%c0_56, %c0_57] : memref<256x2xf32, #tpu.memory_space<vmem>>, vector<256x2xf32>
    %cst_58 = arith.constant dense<0.000000e+00> : vector<1x2xf32>
    %101 = tpu.matmul %99, %100, %cst_58 {dimension_numbers = #tpu.dot_dimension_numbers<[1], [0], [0], [1], [0, 0, 1, 1], [], []>} : vector<1x256xf32>, vector<256x2xf32>, vector<1x2xf32> -> vector<1x2xf32>
    %c0_59 = arith.constant 0 : index
    %c0_60 = arith.constant 0 : index
    %102 = vector.load %arg20[%c0_59, %c0_60] : memref<1x2xf32, #tpu.memory_space<vmem>>, vector<1x2xf32>
    %103 = arith.addf %101, %102 : vector<1x2xf32>
    %c0_61 = arith.constant 0 : index
    %c0_62 = arith.constant 0 : index
    %104 = vector.load %arg21[%c0_61, %c0_62] : memref<1x2xf32, #tpu.memory_space<vmem>>, vector<1x2xf32>
    tpu.vector_store %arg21[%c0_61, %c0_62], %103 {strides = array<i32>} : memref<1x2xf32, #tpu.memory_space<vmem>>, vector<1x2xf32>,
    %cst_63 = arith.constant dense<0xFF800000> : vector<1xf32>
    %105 = vector.multi_reduction <maximumf>, %103, %cst_63 [1] : vector<1x2xf32> to vector<1xf32>
    %106 = vector.shape_cast %105 : vector<1xf32> to vector<1x1xf32>
    %107 = vector.broadcast %106 : vector<1x1xf32> to vector<1x2xf32>
    %108 = arith.subf %103, %107 : vector<1x2xf32>
    %109 = math.exp %108 : vector<1x2xf32>
    %cst_64 = arith.constant dense<0.000000e+00> : vector<1xf32>
    %110 = vector.multi_reduction <add>, %109, %cst_64 [1] : vector<1x2xf32> to vector<1xf32>
    %111 = vector.shape_cast %110 : vector<1xf32> to vector<1x1xf32>
    %112 = vector.broadcast %111 : vector<1x1xf32> to vector<1x2xf32>
    %113 = arith.divf %109, %112 : vector<1x2xf32>
    %c0_65 = arith.constant 0 : index
    %c0_66 = arith.constant 0 : index
    %114 = vector.load %arg22[%c0_65, %c0_66] : memref<1x2xf32, #tpu.memory_space<vmem>>, vector<1x2xf32>
    tpu.vector_store %arg22[%c0_65, %c0_66], %113 {strides = array<i32>} : memref<1x2xf32, #tpu.memory_space<vmem>>, vector<1x2xf32>,
    return
  }
}

</mosaic_0001>

<llo_original>
// kernel: tpu_custom_call.1
$region0: #{tpu_custom_call.1}
  #allocation0 [shape = 'u32[]', space=smem, size = 0x4, offset = 0x4, fixed_abs, tag = 'smem constant byte address 0x4 - core index']
  #allocation1 [shape = 'u32[144,128]{1,0:T(1,128)}', space=vmem, size = 0x12000, scoped, tag = 'internal scratch']
  #allocation2 [shape = 'f32[1,1]{1,0:T(1,128)S(1)}', space=vmem, size = 0x200, scoped, tag = 'scoped memory for tpu_custom_call.1']
  #allocation3 [shape = 'f32[1,1]{1,0:T(1,128)S(1)}', space=vmem, size = 0x200, scoped, tag = 'scoped memory for tpu_custom_call.1']
  %s0 = inlined_call_operand.vmem [shape: f32[16,768], index: 0, kind: input, shape index: {}]
  %s1 = inlined_call_operand.hbm [shape: f32[768,256], index: 1, kind: input, shape index: {}]
  %s2 = inlined_call_operand.vmem [shape: f32[1,256], index: 2, kind: input, shape index: {}]
  %s3 = inlined_call_operand.hbm [shape: f32[256,256], index: 3, kind: input, shape index: {}]
  %s4 = inlined_call_operand.vmem [shape: f32[1,256], index: 4, kind: input, shape index: {}]
  %s5 = inlined_call_operand.hbm [shape: f32[256,256], index: 5, kind: input, shape index: {}]
  %s6 = inlined_call_operand.vmem [shape: f32[1,256], index: 6, kind: input, shape index: {}]
  %s7 = inlined_call_operand.vmem [shape: f32[1,256], index: 7, kind: input, shape index: {}]
  %s8 = inlined_call_operand.<no memory space> [shape: f32[1,1], index: 8, kind: input, shape index: {}]
  %s9 = inlined_call_operand.hbm [shape: f32[256,256], index: 9, kind: input, shape index: {}]
  %s10 = inlined_call_operand.vmem [shape: f32[1,256], index: 10, kind: input, shape index: {}]
  %s11 = inlined_call_operand.hbm [shape: f32[256,256], index: 11, kind: input, shape index: {}]
  %s12 = inlined_call_operand.vmem [shape: f32[1,256], index: 12, kind: input, shape index: {}]
  %s13 = inlined_call_operand.hbm [shape: f32[256,256], index: 13, kind: input, shape index: {}]
  %s14 = inlined_call_operand.vmem [shape: f32[1,256], index: 14, kind: input, shape index: {}]
  %s15 = inlined_call_operand.vmem [shape: f32[1,256], index: 15, kind: input, shape index: {}]
  %s16 = inlined_call_operand.<no memory space> [shape: f32[1,1], index: 16, kind: input, shape index: {}]
  %s17 = inlined_call_operand.hbm [shape: f32[256,256], index: 17, kind: input, shape index: {}]
  %s18 = inlined_call_operand.vmem [shape: f32[1,256], index: 18, kind: input, shape index: {}]
  %s19 = inlined_call_operand.vmem [shape: f32[256,2], index: 19, kind: input, shape index: {}]
  %s20 = inlined_call_operand.vmem [shape: f32[1,2], index: 20, kind: input, shape index: {}]
  %s21 = inlined_call_operand.hbm [shape: f32[1,2], index: 21, kind: output, shape index: {0}]
  %s22 = inlined_call_operand.hbm [shape: f32[1,2], index: 22, kind: output, shape index: {1}]
  %23 = xla_tuple %s21, %s22
  %s24 = sld [smem:[#allocation0]]
  $region130: #{tpu_custom_call.1} parent=0
    _
  %s26 = ssub.s32 1, %s24
  %s27 = scalar_select 0, %s26, %s24
  %v28 = vstv %s8
  %29 = vst [vmem:[#allocation2] sm:$0x1] %v28
  %v30 = vstv %s16
  %31 = vst [vmem:[#allocation3] sm:$0x1] %v30
  $region1: #{tpu_custom_call.1} parent=0
    #allocation4 [shape = 'u8[786432]{0}', space=vmem, size = 0xc0000, scoped, tag = 'input window, operand 1, single buffered']
    #allocation5 [shape = 's32[1]{0}', space=sflag, size = 0x4, scoped, tag = 'scoped memory for tpu_custom_call.1']
    #allocation6 [shape = 's32[1]{0}', space=sflag, size = 0x4, scoped, tag = 'scoped memory for tpu_custom_call.1']
    #allocation7 [shape = 'u8[262144]{0}', space=vmem, size = 0x40000, scoped, tag = 'input window, operand 3, single buffered']
    #allocation8 [shape = 's32[1]{0}', space=sflag, size = 0x4, scoped, tag = 'scoped memory for tpu_custom_call.1']
    #allocation9 [shape = 'u8[262144]{0}', space=vmem, size = 0x40000, scoped, tag = 'input window, operand 5, single buffered']
    #allocation10 [shape = 'u8[262144]{0}', space=vmem, size = 0x40000, scoped, tag = 'input window, operand 9, single buffered']
    #allocation11 [shape = 's32[1]{0}', space=sflag, size = 0x4, scoped, tag = 'scoped memory for tpu_custom_call.1']
    #allocation12 [shape = 'u8[262144]{0}', space=vmem, size = 0x40000, scoped, tag = 'input window, operand 11, single buffered']
    #allocation13 [shape = 'u8[262144]{0}', space=vmem, size = 0x40000, scoped, tag = 'input window, operand 13, single buffered']
    #allocation14 [shape = 's32[1]{0}', space=sflag, size = 0x4, scoped, tag = 'scoped memory for tpu_custom_call.1']
    #allocation15 [shape = 'u8[262144]{0}', space=vmem, size = 0x40000, scoped, tag = 'input window, operand 17, single buffered']
    #allocation16 [shape = 'u8[512]{0}', space=vmem, size = 0x400, scoped, tag = 'output window, operand 0, single buffered']
    #allocation17 [shape = 'u8[512]{0}', space=vmem, size = 0x400, scoped, tag = 'output window, operand 1, single buffered']
    #allocation18 [shape = 's32[1]{0}', space=sflag, size = 0x4, scoped, tag = 'scoped memory for tpu_custom_call.1']
    %32 = vsyncpa [#allocation5], 0
    %33 = vsyncpa [#allocation8], 0
    %34 = vsyncpa [#allocation11], 0
    %35 = vsyncpa [#allocation14], 0
    %36 = vsyncpa [#allocation6], 0
    %37 = vsyncpa [#allocation18], 0
    // Predicated region
    $region2: #{tpu_custom_call.1} parent=1 // pred_check
      _
    $region3: #{tpu_custom_call.1} parent=1 // pred_check_branch
      %39 = sbr.rel (0) target = $region5
    $region4: #{tpu_custom_call.1} parent=1 // pred_region
      _
    $region5: #{tpu_custom_call.1} parent=1 // pred_fallthru
      _
    // Predicated region
    $region6: #{tpu_custom_call.1} parent=1 // pred_check
      _
    $region7: #{tpu_custom_call.1} parent=1 // pred_check_branch
      %41 = sbr.rel (0) target = $region9
    $region8: #{tpu_custom_call.1} parent=1 // pred_region
      %s43 = ssub.s32 24576, 24576
      %44 = vsyncadd [#allocation5], %s43
      %s45 = sshll.u32 [#allocation4], 4
      %s46 = int_to_ptr.vmem [resolvable:$true] %s45
      %51 = dma.hbm_to_vmem [thread:$0]  %s1, 24576, %s46, [#allocation5], 256, 256, 16
    $region9: #{tpu_custom_call.1} parent=1 // pred_fallthru
      _
    // Predicated region
    $region10: #{tpu_custom_call.1} parent=1 // pred_check
      _
    $region11: #{tpu_custom_call.1} parent=1 // pred_check_branch
      %53 = sbr.rel (0) target = $region13
    $region12: #{tpu_custom_call.1} parent=1 // pred_region
      _
    $region13: #{tpu_custom_call.1} parent=1 // pred_fallthru
      _
    // Predicated region
    $region14: #{tpu_custom_call.1} parent=1 // pred_check
      _
    $region15: #{tpu_custom_call.1} parent=1 // pred_check_branch
      %55 = sbr.rel (0) target = $region17
    $region16: #{tpu_custom_call.1} parent=1 // pred_region
      %s57 = ssub.s32 8192, 8192
      %58 = vsyncadd [#allocation8], %s57
      %s59 = sshll.u32 [#allocation7], 4
      %s60 = int_to_ptr.vmem [resolvable:$true] %s59
      %65 = dma.hbm_to_vmem [thread:$0]  %s3, 8192, %s60, [#allocation8], 256, 256, 16
    $region17: #{tpu_custom_call.1} parent=1 // pred_fallthru
      _
    // Predicated region
    $region18: #{tpu_custom_call.1} parent=1 // pred_check
      _
    $region19: #{tpu_custom_call.1} parent=1 // pred_check_branch
      %67 = sbr.rel (0) target = $region21
    $region20: #{tpu_custom_call.1} parent=1 // pred_region
      _
    $region21: #{tpu_custom_call.1} parent=1 // pred_fallthru
      _
    // Predicated region
    $region22: #{tpu_custom_call.1} parent=1 // pred_check
      _
    $region23: #{tpu_custom_call.1} parent=1 // pred_check_branch
      %69 = sbr.rel (0) target = $region25
    $region24: #{tpu_custom_call.1} parent=1 // pred_region
      %s71 = ssub.s32 8192, 8192
      %72 = vsyncadd [#allocation8], %s71
      %s73 = sshll.u32 [#allocation9], 4
      %s74 = int_to_ptr.vmem [resolvable:$true] %s73
      %79 = dma.hbm_to_vmem [thread:$0]  %s5, 8192, %s74, [#allocation8], 256, 256, 16
    $region25: #{tpu_custom_call.1} parent=1 // pred_fallthru
      _
    // Predicated region
    $region26: #{tpu_custom_call.1} parent=1 // pred_check
      _
    $region27: #{tpu_custom_call.1} parent=1 // pred_check_branch
      %81 = sbr.rel (0) target = $region29
    $region28: #{tpu_custom_call.1} parent=1 // pred_region
      _
    $region29: #{tpu_custom_call.1} parent=1 // pred_fallthru
      _
    // Predicated region
    $region30: #{tpu_custom_call.1} parent=1 // pred_check
      _
    $region31: #{tpu_custom_call.1} parent=1 // pred_check_branch
      %83 = sbr.rel (0) target = $region33
    $region32: #{tpu_custom_call.1} parent=1 // pred_region
      _
    $region33: #{tpu_custom_call.1} parent=1 // pred_fallthru
      _
    // Predicated region
    $region34: #{tpu_custom_call.1} parent=1 // pred_check
      _
    $region35: #{tpu_custom_call.1} parent=1 // pred_check_branch
      %85 = sbr.rel (0) target = $region37
    $region36: #{tpu_custom_call.1} parent=1 // pred_region
      _
    $region37: #{tpu_custom_call.1} parent=1 // pred_fallthru
      _
    // Predicated region
    $region38: #{tpu_custom_call.1} parent=1 // pred_check
      _
    $region39: #{tpu_custom_call.1} parent=1 // pred_check_branch
      %87 = sbr.rel (0) target = $region41
    $region40: #{tpu_custom_call.1} parent=1 // pred_region
      %s89 = ssub.s32 8192, 8192
      %90 = vsyncadd [#allocation11], %s89
      %s91 = sshll.u32 [#allocation10], 4
      %s92 = int_to_ptr.vmem [resolvable:$true] %s91
      %97 = dma.hbm_to_vmem [thread:$0]  %s9, 8192, %s92, [#allocation11], 256, 256, 16
    $region41: #{tpu_custom_call.1} parent=1 // pred_fallthru
      _
    // Predicated region
    $region42: #{tpu_custom_call.1} parent=1 // pred_check
      _
    $region43: #{tpu_custom_call.1} parent=1 // pred_check_branch
      %99 = sbr.rel (0) target = $region45
    $region44: #{tpu_custom_call.1} parent=1 // pred_region
      _
    $region45: #{tpu_custom_call.1} parent=1 // pred_fallthru
      _
    // Predicated region
    $region46: #{tpu_custom_call.1} parent=1 // pred_check
      _
    $region47: #{tpu_custom_call.1} parent=1 // pred_check_branch
      %101 = sbr.rel (0) target = $region49
    $region48: #{tpu_custom_call.1} parent=1 // pred_region
      %s103 = ssub.s32 8192, 8192
      %104 = vsyncadd [#allocation11], %s103
      %s105 = sshll.u32 [#allocation12], 4
      %s106 = int_to_ptr.vmem [resolvable:$true] %s105
      %111 = dma.hbm_to_vmem [thread:$0]  %s11, 8192, %s106, [#allocation11], 256, 256, 16
    $region49: #{tpu_custom_call.1} parent=1 // pred_fallthru
      _
    // Predicated region
    $region50: #{tpu_custom_call.1} parent=1 // pred_check
      _
    $region51: #{tpu_custom_call.1} parent=1 // pred_check_branch
      %113 = sbr.rel (0) target = $region53
    $region52: #{tpu_custom_call.1} parent=1 // pred_region
      _
    $region53: #{tpu_custom_call.1} parent=1 // pred_fallthru
      _
    // Predicated region
    $region54: #{tpu_custom_call.1} parent=1 // pred_check
      _
    $region55: #{tpu_custom_call.1} parent=1 // pred_check_branch
      %115 = sbr.rel (0) target = $region57
    $region56: #{tpu_custom_call.1} parent=1 // pred_region
      %s117 = ssub.s32 8192, 8192
      %118 = vsyncadd [#allocation14], %s117
      %s119 = sshll.u32 [#allocation13], 4
      %s120 = int_to_ptr.vmem [resolvable:$true] %s119
      %125 = dma.hbm_to_vmem [thread:$0]  %s13, 8192, %s120, [#allocation14], 256, 256, 16
    $region57: #{tpu_custom_call.1} parent=1 // pred_fallthru
      _
    // Predicated region
    $region58: #{tpu_custom_call.1} parent=1 // pred_check
      _
    $region59: #{tpu_custom_call.1} parent=1 // pred_check_branch
      %127 = sbr.rel (0) target = $region61
    $region60: #{tpu_custom_call.1} parent=1 // pred_region
      _
    $region61: #{tpu_custom_call.1} parent=1 // pred_fallthru
      _
    // Predicated region
    $region62: #{tpu_custom_call.1} parent=1 // pred_check
      _
    $region63: #{tpu_custom_call.1} parent=1 // pred_check_branch
      %129 = sbr.rel (0) target = $region65
    $region64: #{tpu_custom_call.1} parent=1 // pred_region
      _
    $region65: #{tpu_custom_call.1} parent=1 // pred_fallthru
      _
    // Predicated region
    $region66: #{tpu_custom_call.1} parent=1 // pred_check
      _
    $region67: #{tpu_custom_call.1} parent=1 // pred_check_branch
      %131 = sbr.rel (0) target = $region69
    $region68: #{tpu_custom_call.1} parent=1 // pred_region
      _
    $region69: #{tpu_custom_call.1} parent=1 // pred_fallthru
      _
    // Predicated region
    $region70: #{tpu_custom_call.1} parent=1 // pred_check
      _
    $region71: #{tpu_custom_call.1} parent=1 // pred_check_branch
      %133 = sbr.rel (0) target = $region73
    $region72: #{tpu_custom_call.1} parent=1 // pred_region
      %s135 = ssub.s32 8192, 8192
      %136 = vsyncadd [#allocation14], %s135
      %s137 = sshll.u32 [#allocation15], 4
      %s138 = int_to_ptr.vmem [resolvable:$true] %s137
      %143 = dma.hbm_to_vmem [thread:$0]  %s17, 8192, %s138, [#allocation14], 256, 256, 16
    $region73: #{tpu_custom_call.1} parent=1 // pred_fallthru
      _
    // Predicated region
    $region74: #{tpu_custom_call.1} parent=1 // pred_check
      _
    $region75: #{tpu_custom_call.1} parent=1 // pred_check_branch
      %145 = sbr.rel (0) target = $region77
    $region76: #{tpu_custom_call.1} parent=1 // pred_region
      _
    $region77: #{tpu_custom_call.1} parent=1 // pred_fallthru
      _
    // Predicated region
    $region78: #{tpu_custom_call.1} parent=1 // pred_check
      _
    $region79: #{tpu_custom_call.1} parent=1 // pred_check_branch
      %147 = sbr.rel (0) target = $region81
    $region80: #{tpu_custom_call.1} parent=1 // pred_region
      _
    $region81: #{tpu_custom_call.1} parent=1 // pred_fallthru
      _
    // Predicated region
    $region82: #{tpu_custom_call.1} parent=1 // pred_check
      _
    $region83: #{tpu_custom_call.1} parent=1 // pred_check_branch
      %149 = sbr.rel (0) target = $region85
    $region84: #{tpu_custom_call.1} parent=1 // pred_region
      _
    $region85: #{tpu_custom_call.1} parent=1 // pred_fallthru
      _
    // Predicated region
    $region86: #{tpu_custom_call.1} parent=1 // pred_check
      _
    $region87: #{tpu_custom_call.1} parent=1 // pred_check_branch
      %151 = sbr.rel (0) target = $region89
    $region88: #{tpu_custom_call.1} parent=1 // pred_region
      %152 = dma.done [#allocation5], 24576
    $region89: #{tpu_custom_call.1} parent=1 // pred_fallthru
      _
    // Predicated region
    $region90: #{tpu_custom_call.1} parent=1 // pred_check
      _
    $region91: #{tpu_custom_call.1} parent=1 // pred_check_branch
      %154 = sbr.rel (0) target = $region93
    $region92: #{tpu_custom_call.1} parent=1 // pred_region
      %155 = dma.done [#allocation8], 8192
    $region93: #{tpu_custom_call.1} parent=1 // pred_fallthru
      _
    // Predicated region
    $region94: #{tpu_custom_call.1} parent=1 // pred_check
      _
    $region95: #{tpu_custom_call.1} parent=1 // pred_check_branch
      %157 = sbr.rel (0) target = $region97
    $region96: #{tpu_custom_call.1} parent=1 // pred_region
      %158 = dma.done [#allocation8], 8192
    $region97: #{tpu_custom_call.1} parent=1 // pred_fallthru
      _
    // Predicated region
    $region98: #{tpu_custom_call.1} parent=1 // pred_check
      _
    $region99: #{tpu_custom_call.1} parent=1 // pred_check_branch
      %160 = sbr.rel (0) target = $region101
    $region100: #{tpu_custom_call.1} parent=1 // pred_region
      %161 = dma.done [#allocation11], 8192
    $region101: #{tpu_custom_call.1} parent=1 // pred_fallthru
      _
    // Predicated region
    $region102: #{tpu_custom_call.1} parent=1 // pred_check
      _
    $region103: #{tpu_custom_call.1} parent=1 // pred_check_branch
      %163 = sbr.rel (0) target = $region105
    $region104: #{tpu_custom_call.1} parent=1 // pred_region
      %164 = dma.done [#allocation11], 8192
    $region105: #{tpu_custom_call.1} parent=1 // pred_fallthru
      _
    // Predicated region
    $region106: #{tpu_custom_call.1} parent=1 // pred_check
      _
    $region107: #{tpu_custom_call.1} parent=1 // pred_check_branch
      %166 = sbr.rel (0) target = $region109
    $region108: #{tpu_custom_call.1} parent=1 // pred_region
      %167 = dma.done [#allocation14], 8192
    $region109: #{tpu_custom_call.1} parent=1 // pred_fallthru
      _
    // Predicated region
    $region110: #{tpu_custom_call.1} parent=1 // pred_check
      _
    $region111: #{tpu_custom_call.1} parent=1 // pred_check_branch
      %169 = sbr.rel (0) target = $region113
    $region112: #{tpu_custom_call.1} parent=1 // pred_region
      %170 = dma.done [#allocation14], 8192
    $region113: #{tpu_custom_call.1} parent=1 // pred_fallthru
      _
    %v171 = vld [vmem:[%s0] sm:$0xff]
    %v172 = vld [vmem:[%s0 + $0x8] sm:$0xff]
    %v173 = vld [vmem:[%s0 + $0x10] sm:$0xff]
    %v174 = vld [vmem:[%s0 + $0x18] sm:$0xff]
    %v175 = vld [vmem:[%s0 + $0x20] sm:$0xff]
    %v176 = vld [vmem:[%s0 + $0x28] sm:$0xff]
    %v177 = vld [vmem:[%s0 + $0x30] sm:$0xff]
    %v178 = vld [vmem:[%s0 + $0x38] sm:$0xff]
    %v179 = vld [vmem:[%s0 + $0x40] sm:$0xff]
    %v180 = vld [vmem:[%s0 + $0x48] sm:$0xff]
    %v181 = vld [vmem:[%s0 + $0x50] sm:$0xff]
    %v182 = vld [vmem:[%s0 + $0x58] sm:$0xff]
    %v183 = vld [vmem:[#allocation4] sm:$0xff]
    %v184 = vld [vmem:[#allocation4 + $0x8] sm:$0xff]
    %v185 = vld [vmem:[#allocation4 + $0x10] sm:$0xff]
    %v186 = vld [vmem:[#allocation4 + $0x18] sm:$0xff]
    %v187 = vld [vmem:[#allocation4 + $0x20] sm:$0xff]
    %v188 = vld [vmem:[#allocation4 + $0x28] sm:$0xff]
    %v189 = vld [vmem:[#allocation4 + $0x30] sm:$0xff]
    %v190 = vld [vmem:[#allocation4 + $0x38] sm:$0xff]
    %v191 = vld [vmem:[#allocation4 + $0x40] sm:$0xff]
    %v192 = vld [vmem:[#allocation4 + $0x48] sm:$0xff]
    %v193 = vld [vmem:[#allocation4 + $0x50] sm:$0xff]
    %v194 = vld [vmem:[#allocation4 + $0x58] sm:$0xff]
    %v195 = vld [vmem:[#allocation4 + $0x60] sm:$0xff]
    %v196 = vld [vmem:[#allocation4 + $0x68] sm:$0xff]
    %v197 = vld [vmem:[#allocation4 + $0x70] sm:$0xff]
    %v198 = vld [vmem:[#allocation4 + $0x78] sm:$0xff]
    %v199 = vld [vmem:[#allocation4 + $0x80] sm:$0xff]
    %v200 = vld [vmem:[#allocation4 + $0x88] sm:$0xff]
    %v201 = vld [vmem:[#allocation4 + $0x90] sm:$0xff]
    %v202 = vld [vmem:[#allocation4 + $0x98] sm:$0xff]
    %v203 = vld [vmem:[#allocation4 + $0xa0] sm:$0xff]
    %v204 = vld [vmem:[#allocation4 + $0xa8] sm:$0xff]
    %v205 = vld [vmem:[#allocation4 + $0xb0] sm:$0xff]
    %v206 = vld [vmem:[#allocation4 + $0xb8] sm:$0xff]
    %v207 = vld [vmem:[#allocation4 + $0xc0] sm:$0xff]
    %v208 = vld [vmem:[#allocation4 + $0xc8] sm:$0xff]
    %v209 = vld [vmem:[#allocation4 + $0xd0] sm:$0xff]
    %v210 = vld [vmem:[#allocation4 + $0xd8] sm:$0xff]
    %v211 = vld [vmem:[#allocation4 + $0xe0] sm:$0xff]
    %v212 = vld [vmem:[#allocation4 + $0xe8] sm:$0xff]
    %v213 = vld [vmem:[#allocation4 + $0xf0] sm:$0xff]
    %v214 = vld [vmem:[#allocation4 + $0xf8] sm:$0xff]
    %v215 = vld [vmem:[#allocation4 + $0x100] sm:$0xff]
    %v216 = vld [vmem:[#allocation4 + $0x108] sm:$0xff]
    %v217 = vld [vmem:[#allocation4 + $0x110] sm:$0xff]
    %v218 = vld [vmem:[#allocation4 + $0x118] sm:$0xff]
    %v219 = vld [vmem:[#allocation4 + $0x120] sm:$0xff]
    %v220 = vld [vmem:[#allocation4 + $0x128] sm:$0xff]
    %v221 = vld [vmem:[#allocation4 + $0x130] sm:$0xff]
    %v222 = vld [vmem:[#allocation4 + $0x138] sm:$0xff]
    %v223 = vld [vmem:[#allocation4 + $0x140] sm:$0xff]
    %v224 = vld [vmem:[#allocation4 + $0x148] sm:$0xff]
    %v225 = vld [vmem:[#allocation4 + $0x150] sm:$0xff]
    %v226 = vld [vmem:[#allocation4 + $0x158] sm:$0xff]
    %v227 = vld [vmem:[#allocation4 + $0x160] sm:$0xff]
    %v228 = vld [vmem:[#allocation4 + $0x168] sm:$0xff]
    %v229 = vld [vmem:[#allocation4 + $0x170] sm:$0xff]
    %v230 = vld [vmem:[#allocation4 + $0x178] sm:$0xff]
    %v231 = vld [vmem:[#allocation4 + $0x180] sm:$0xff]
    %v232 = vld [vmem:[#allocation4 + $0x188] sm:$0xff]
    %v233 = vld [vmem:[#allocation4 + $0x190] sm:$0xff]
    %v234 = vld [vmem:[#allocation4 + $0x198] sm:$0xff]
    %v235 = vld [vmem:[#allocation4 + $0x1a0] sm:$0xff]
    %v236 = vld [vmem:[#allocation4 + $0x1a8] sm:$0xff]
    %v237 = vld [vmem:[#allocation4 + $0x1b0] sm:$0xff]
    %v238 = vld [vmem:[#allocation4 + $0x1b8] sm:$0xff]
    %v239 = vld [vmem:[#allocation4 + $0x1c0] sm:$0xff]
    %v240 = vld [vmem:[#allocation4 + $0x1c8] sm:$0xff]
    %v241 = vld [vmem:[#allocation4 + $0x1d0] sm:$0xff]
    %v242 = vld [vmem:[#allocation4 + $0x1d8] sm:$0xff]
    %v243 = vld [vmem:[#allocation4 + $0x1e0] sm:$0xff]
    %v244 = vld [vmem:[#allocation4 + $0x1e8] sm:$0xff]
    %v245 = vld [vmem:[#allocation4 + $0x1f0] sm:$0xff]
    %v246 = vld [vmem:[#allocation4 + $0x1f8] sm:$0xff]
    %v247 = vld [vmem:[#allocation4 + $0x200] sm:$0xff]
    %v248 = vld [vmem:[#allocation4 + $0x208] sm:$0xff]
    %v249 = vld [vmem:[#allocation4 + $0x210] sm:$0xff]
    %v250 = vld [vmem:[#allocation4 + $0x218] sm:$0xff]
    %v251 = vld [vmem:[#allocation4 + $0x220] sm:$0xff]
    %v252 = vld [vmem:[#allocation4 + $0x228] sm:$0xff]
    %v253 = vld [vmem:[#allocation4 + $0x230] sm:$0xff]
    %v254 = vld [vmem:[#allocation4 + $0x238] sm:$0xff]
    %v255 = vld [vmem:[#allocation4 + $0x240] sm:$0xff]
    %v256 = vld [vmem:[#allocation4 + $0x248] sm:$0xff]
    %v257 = vld [vmem:[#allocation4 + $0x250] sm:$0xff]
    %v258 = vld [vmem:[#allocation4 + $0x258] sm:$0xff]
    %v259 = vld [vmem:[#allocation4 + $0x260] sm:$0xff]
    %v260 = vld [vmem:[#allocation4 + $0x268] sm:$0xff]
    %v261 = vld [vmem:[#allocation4 + $0x270] sm:$0xff]
    %v262 = vld [vmem:[#allocation4 + $0x278] sm:$0xff]
    %v263 = vld [vmem:[#allocation4 + $0x280] sm:$0xff]
    %v264 = vld [vmem:[#allocation4 + $0x288] sm:$0xff]
    %v265 = vld [vmem:[#allocation4 + $0x290] sm:$0xff]
    %v266 = vld [vmem:[#allocation4 + $0x298] sm:$0xff]
    %v267 = vld [vmem:[#allocation4 + $0x2a0] sm:$0xff]
    %v268 = vld [vmem:[#allocation4 + $0x2a8] sm:$0xff]
    %v269 = vld [vmem:[#allocation4 + $0x2b0] sm:$0xff]
    %v270 = vld [vmem:[#allocation4 + $0x2b8] sm:$0xff]
    %v271 = vld [vmem:[#allocation4 + $0x2c0] sm:$0xff]
    %v272 = vld [vmem:[#allocation4 + $0x2c8] sm:$0xff]
    %v273 = vld [vmem:[#allocation4 + $0x2d0] sm:$0xff]
    %v274 = vld [vmem:[#allocation4 + $0x2d8] sm:$0xff]
    %v275 = vld [vmem:[#allocation4 + $0x2e0] sm:$0xff]
    %v276 = vld [vmem:[#allocation4 + $0x2e8] sm:$0xff]
    %v277 = vld [vmem:[#allocation4 + $0x2f0] sm:$0xff]
    %v278 = vld [vmem:[#allocation4 + $0x2f8] sm:$0xff]
    %v279 = vld [vmem:[#allocation4 + $0x300] sm:$0xff]
    %v280 = vld [vmem:[#allocation4 + $0x308] sm:$0xff]
    %v281 = vld [vmem:[#allocation4 + $0x310] sm:$0xff]
    %v282 = vld [vmem:[#allocation4 + $0x318] sm:$0xff]
    %v283 = vld [vmem:[#allocation4 + $0x320] sm:$0xff]
    %v284 = vld [vmem:[#allocation4 + $0x328] sm:$0xff]
    %v285 = vld [vmem:[#allocation4 + $0x330] sm:$0xff]
    %v286 = vld [vmem:[#allocation4 + $0x338] sm:$0xff]
    %v287 = vld [vmem:[#allocation4 + $0x340] sm:$0xff]
    %v288 = vld [vmem:[#allocation4 + $0x348] sm:$0xff]
    %v289 = vld [vmem:[#allocation4 + $0x350] sm:$0xff]
    %v290 = vld [vmem:[#allocation4 + $0x358] sm:$0xff]
    %v291 = vld [vmem:[#allocation4 + $0x360] sm:$0xff]
    %v292 = vld [vmem:[#allocation4 + $0x368] sm:$0xff]
    %v293 = vld [vmem:[#allocation4 + $0x370] sm:$0xff]
    %v294 = vld [vmem:[#allocation4 + $0x378] sm:$0xff]
    %v295 = vld [vmem:[#allocation4 + $0x380] sm:$0xff]
    %v296 = vld [vmem:[#allocation4 + $0x388] sm:$0xff]
    %v297 = vld [vmem:[#allocation4 + $0x390] sm:$0xff]
    %v298 = vld [vmem:[#allocation4 + $0x398] sm:$0xff]
    %v299 = vld [vmem:[#allocation4 + $0x3a0] sm:$0xff]
    %v300 = vld [vmem:[#allocation4 + $0x3a8] sm:$0xff]
    %v301 = vld [vmem:[#allocation4 + $0x3b0] sm:$0xff]
    %v302 = vld [vmem:[#allocation4 + $0x3b8] sm:$0xff]
    %v303 = vld [vmem:[#allocation4 + $0x3c0] sm:$0xff]
    %v304 = vld [vmem:[#allocation4 + $0x3c8] sm:$0xff]
    %v305 = vld [vmem:[#allocation4 + $0x3d0] sm:$0xff]
    %v306 = vld [vmem:[#allocation4 + $0x3d8] sm:$0xff]
    %v307 = vld [vmem:[#allocation4 + $0x3e0] sm:$0xff]
    %v308 = vld [vmem:[#allocation4 + $0x3e8] sm:$0xff]
    %v309 = vld [vmem:[#allocation4 + $0x3f0] sm:$0xff]
    %v310 = vld [vmem:[#allocation4 + $0x3f8] sm:$0xff]
    %v311 = vld [vmem:[#allocation4 + $0x400] sm:$0xff]
    %v312 = vld [vmem:[#allocation4 + $0x408] sm:$0xff]
    %v313 = vld [vmem:[#allocation4 + $0x410] sm:$0xff]
    %v314 = vld [vmem:[#allocation4 + $0x418] sm:$0xff]
    %v315 = vld [vmem:[#allocation4 + $0x420] sm:$0xff]
    %v316 = vld [vmem:[#allocation4 + $0x428] sm:$0xff]
    %v317 = vld [vmem:[#allocation4 + $0x430] sm:$0xff]
    %v318 = vld [vmem:[#allocation4 + $0x438] sm:$0xff]
    %v319 = vld [vmem:[#allocation4 + $0x440] sm:$0xff]
    %v320 = vld [vmem:[#allocation4 + $0x448] sm:$0xff]
    %v321 = vld [vmem:[#allocation4 + $0x450] sm:$0xff]
    %v322 = vld [vmem:[#allocation4 + $0x458] sm:$0xff]
    %v323 = vld [vmem:[#allocation4 + $0x460] sm:$0xff]
    %v324 = vld [vmem:[#allocation4 + $0x468] sm:$0xff]
    %v325 = vld [vmem:[#allocation4 + $0x470] sm:$0xff]
    %v326 = vld [vmem:[#allocation4 + $0x478] sm:$0xff]
    %v327 = vld [vmem:[#allocation4 + $0x480] sm:$0xff]
    %v328 = vld [vmem:[#allocation4 + $0x488] sm:$0xff]
    %v329 = vld [vmem:[#allocation4 + $0x490] sm:$0xff]
    %v330 = vld [vmem:[#allocation4 + $0x498] sm:$0xff]
    %v331 = vld [vmem:[#allocation4 + $0x4a0] sm:$0xff]
    %v332 = vld [vmem:[#allocation4 + $0x4a8] sm:$0xff]
    %v333 = vld [vmem:[#allocation4 + $0x4b0] sm:$0xff]
    %v334 = vld [vmem:[#allocation4 + $0x4b8] sm:$0xff]
    %v335 = vld [vmem:[#allocation4 + $0x4c0] sm:$0xff]
    %v336 = vld [vmem:[#allocation4 + $0x4c8] sm:$0xff]
    %v337 = vld [vmem:[#allocation4 + $0x4d0] sm:$0xff]
    %v338 = vld [vmem:[#allocation4 + $0x4d8] sm:$0xff]
    %v339 = vld [vmem:[#allocation4 + $0x4e0] sm:$0xff]
    %v340 = vld [vmem:[#allocation4 + $0x4e8] sm:$0xff]
    %v341 = vld [vmem:[#allocation4 + $0x4f0] sm:$0xff]
    %v342 = vld [vmem:[#allocation4 + $0x4f8] sm:$0xff]
    %v343 = vld [vmem:[#allocation4 + $0x500] sm:$0xff]
    %v344 = vld [vmem:[#allocation4 + $0x508] sm:$0xff]
    %v345 = vld [vmem:[#allocation4 + $0x510] sm:$0xff]
    %v346 = vld [vmem:[#allocation4 + $0x518] sm:$0xff]
    %v347 = vld [vmem:[#allocation4 + $0x520] sm:$0xff]
    %v348 = vld [vmem:[#allocation4 + $0x528] sm:$0xff]
    %v349 = vld [vmem:[#allocation4 + $0x530] sm:$0xff]
    %v350 = vld [vmem:[#allocation4 + $0x538] sm:$0xff]
    %v351 = vld [vmem:[#allocation4 + $0x540] sm:$0xff]
    %v352 = vld [vmem:[#allocation4 + $0x548] sm:$0xff]
    %v353 = vld [vmem:[#allocation4 + $0x550] sm:$0xff]
    %v354 = vld [vmem:[#allocation4 + $0x558] sm:$0xff]
    %v355 = vld [vmem:[#allocation4 + $0x560] sm:$0xff]
    %v356 = vld [vmem:[#allocation4 + $0x568] sm:$0xff]
    %v357 = vld [vmem:[#allocation4 + $0x570] sm:$0xff]
    %v358 = vld [vmem:[#allocation4 + $0x578] sm:$0xff]
    %v359 = vld [vmem:[#allocation4 + $0x580] sm:$0xff]
    %v360 = vld [vmem:[#allocation4 + $0x588] sm:$0xff]
    %v361 = vld [vmem:[#allocation4 + $0x590] sm:$0xff]
    %v362 = vld [vmem:[#allocation4 + $0x598] sm:$0xff]
    %v363 = vld [vmem:[#allocation4 + $0x5a0] sm:$0xff]
    %v364 = vld [vmem:[#allocation4 + $0x5a8] sm:$0xff]
    %v365 = vld [vmem:[#allocation4 + $0x5b0] sm:$0xff]
    %v366 = vld [vmem:[#allocation4 + $0x5b8] sm:$0xff]
    %v367 = vld [vmem:[#allocation4 + $0x5c0] sm:$0xff]
    %v368 = vld [vmem:[#allocation4 + $0x5c8] sm:$0xff]
    %v369 = vld [vmem:[#allocation4 + $0x5d0] sm:$0xff]
    %v370 = vld [vmem:[#allocation4 + $0x5d8] sm:$0xff]
    %v371 = vld [vmem:[#allocation4 + $0x5e0] sm:$0xff]
    %v372 = vld [vmem:[#allocation4 + $0x5e8] sm:$0xff]
    %v373 = vld [vmem:[#allocation4 + $0x5f0] sm:$0xff]
    %v374 = vld [vmem:[#allocation4 + $0x5f8] sm:$0xff]
    %v375 = vld [vmem:[%s2] sm:$0x3]
    %v377 = vlaneseq
    %v378 = vshrl.u32 %v377, 7
    %v379 = vsub.s32 0, %v378
    %v380 = vrot.slane %v375, %v379
    %v381 = vlaneseq
    %v382 = vshrl.u32 %v381, 7
    %v383 = vsub.s32 1, %v382
    %v384 = vrot.slane %v375, %v383
    %387 = vmatprep.subr.mxu0 %v214
    %388 = vmatpush1.msra.mxu0 %v213
    %389 = vmatprep.subr.mxu0 %v212
    %390 = vmatpush1.msra.mxu0 %v211
    %391 = vmatprep.subr.mxu0 %v210
    %392 = vmatpush1.msra.mxu0 %v209
    %393 = vmatprep.subr.mxu0 %v208
    %394 = vmatpush1.msra.mxu0 %v207
    %395 = vmatprep.subr.mxu0 %v206
    %396 = vmatpush1.msra.mxu0 %v205
    %397 = vmatprep.subr.mxu0 %v204
    %398 = vmatpush1.msra.mxu0 %v203
    %399 = vmatprep.subr.mxu0 %v202
    %400 = vmatpush1.msra.mxu0 %v201
    %401 = vmatprep.subr.mxu0 %v200
    %402 = vmatpush1.msra.mxu0 %v199
    %403 = vmatprep.subr.mxu0 %v198
    %404 = vmatpush1.msra.mxu0 %v197
    %405 = vmatprep.subr.mxu0 %v196
    %406 = vmatpush1.msra.mxu0 %v195
    %407 = vmatprep.subr.mxu0 %v194
    %408 = vmatpush1.msra.mxu0 %v193
    %409 = vmatprep.subr.mxu0 %v192
    %410 = vmatpush1.msra.mxu0 %v191
    %411 = vmatprep.subr.mxu0 %v190
    %412 = vmatpush1.msra.mxu0 %v189
    %413 = vmatprep.subr.mxu0 %v188
    %414 = vmatpush1.msra.mxu0 %v187
    %415 = vmatprep.subr.mxu0 %v186
    %416 = vmatpush1.msra.mxu0 %v185
    %417 = vmatprep.subr.mxu0 %v184
    %418 = vmatpush1.msra.mxu0 %v183
    %419 = vmatprep.subr.mxu0 %v246
    %420 = vmatpush2.msra.mxu0 %v245
    %421 = vmatprep.subr.mxu0 %v244
    %422 = vmatpush2.msra.mxu0 %v243
    %423 = vmatprep.subr.mxu0 %v242
    %424 = vmatpush2.msra.mxu0 %v241
    %425 = vmatprep.subr.mxu0 %v240
    %426 = vmatpush2.msra.mxu0 %v239
    %427 = vmatprep.subr.mxu0 %v238
    %428 = vmatpush2.msra.mxu0 %v237
    %429 = vmatprep.subr.mxu0 %v236
    %430 = vmatpush2.msra.mxu0 %v235
    %431 = vmatprep.subr.mxu0 %v234
    %432 = vmatpush2.msra.mxu0 %v233
    %433 = vmatprep.subr.mxu0 %v232
    %434 = vmatpush2.msra.mxu0 %v231
    %435 = vmatprep.subr.mxu0 %v230
    %436 = vmatpush2.msra.mxu0 %v229
    %437 = vmatprep.subr.mxu0 %v228
    %438 = vmatpush2.msra.mxu0 %v227
    %439 = vmatprep.subr.mxu0 %v226
    %440 = vmatpush2.msra.mxu0 %v225
    %441 = vmatprep.subr.mxu0 %v224
    %442 = vmatpush2.msra.mxu0 %v223
    %443 = vmatprep.subr.mxu0 %v222
    %444 = vmatpush2.msra.mxu0 %v221
    %445 = vmatprep.subr.mxu0 %v220
    %446 = vmatpush2.msra.mxu0 %v219
    %447 = vmatprep.subr.mxu0 %v218
    %448 = vmatpush2.msra.mxu0 %v217
    %449 = vmatprep.subr.mxu0 %v216
    %450 = vmatpush2.msra.mxu0 %v215
    %451 = vmatprep.mubr.f32.mxu0 %v172
    %452 = vmatmul.mubr.f32.gmra.mxu0 %v171
    %v453 = vpop.f32.mrf.mxu0
    %v454 = vadd.f32 %v380, %v453
    %v455 = vpop.f32.mrf.mxu0
    %v456 = vadd.f32 %v384, %v455
    %457 = vmatprep.mubr.f32.mxu0 %v178
    %458 = vmatmul.mubr.f32.gmra.mxu0 %v177
    %v459 = vpop.f32.mrf.mxu0
    %v460 = vadd.f32 %v380, %v459
    %v461 = vpop.f32.mrf.mxu0
    %v462 = vadd.f32 %v384, %v461
    %463 = vdwg.mxu0
    %464 = vmatprep.subr.mxu0 %v278
    %465 = vmatpush1.msra.mxu0 %v277
    %466 = vmatprep.subr.mxu0 %v276
    %467 = vmatpush1.msra.mxu0 %v275
    %468 = vmatprep.subr.mxu0 %v274
    %469 = vmatpush1.msra.mxu0 %v273
    %470 = vmatprep.subr.mxu0 %v272
    %471 = vmatpush1.msra.mxu0 %v271
    %472 = vmatprep.subr.mxu0 %v270
    %473 = vmatpush1.msra.mxu0 %v269
    %474 = vmatprep.subr.mxu0 %v268
    %475 = vmatpush1.msra.mxu0 %v267
    %476 = vmatprep.subr.mxu0 %v266
    %477 = vmatpush1.msra.mxu0 %v265
    %478 = vmatprep.subr.mxu0 %v264
    %479 = vmatpush1.msra.mxu0 %v263
    %480 = vmatprep.subr.mxu0 %v262
    %481 = vmatpush1.msra.mxu0 %v261
    %482 = vmatprep.subr.mxu0 %v260
    %483 = vmatpush1.msra.mxu0 %v259
    %484 = vmatprep.subr.mxu0 %v258
    %485 = vmatpush1.msra.mxu0 %v257
    %486 = vmatprep.subr.mxu0 %v256
    %487 = vmatpush1.msra.mxu0 %v255
    %488 = vmatprep.subr.mxu0 %v254
    %489 = vmatpush1.msra.mxu0 %v253
    %490 = vmatprep.subr.mxu0 %v252
    %491 = vmatpush1.msra.mxu0 %v251
    %492 = vmatprep.subr.mxu0 %v250
    %493 = vmatpush1.msra.mxu0 %v249
    %494 = vmatprep.subr.mxu0 %v248
    %495 = vmatpush1.msra.mxu0 %v247
    %496 = vmatprep.subr.mxu0 %v310
    %497 = vmatpush2.msra.mxu0 %v309
    %498 = vmatprep.subr.mxu0 %v308
    %499 = vmatpush2.msra.mxu0 %v307
    %500 = vmatprep.subr.mxu0 %v306
    %501 = vmatpush2.msra.mxu0 %v305
    %502 = vmatprep.subr.mxu0 %v304
    %503 = vmatpush2.msra.mxu0 %v303
    %504 = vmatprep.subr.mxu0 %v302
    %505 = vmatpush2.msra.mxu0 %v301
    %506 = vmatprep.subr.mxu0 %v300
    %507 = vmatpush2.msra.mxu0 %v299
    %508 = vmatprep.subr.mxu0 %v298
    %509 = vmatpush2.msra.mxu0 %v297
    %510 = vmatprep.subr.mxu0 %v296
    %511 = vmatpush2.msra.mxu0 %v295
    %512 = vmatprep.subr.mxu0 %v294
    %513 = vmatpush2.msra.mxu0 %v293
    %514 = vmatprep.subr.mxu0 %v292
    %515 = vmatpush2.msra.mxu0 %v291
    %516 = vmatprep.subr.mxu0 %v290
    %517 = vmatpush2.msra.mxu0 %v289
    %518 = vmatprep.subr.mxu0 %v288
    %519 = vmatpush2.msra.mxu0 %v287
    %520 = vmatprep.subr.mxu0 %v286
    %521 = vmatpush2.msra.mxu0 %v285
    %522 = vmatprep.subr.mxu0 %v284
    %523 = vmatpush2.msra.mxu0 %v283
    %524 = vmatprep.subr.mxu0 %v282
    %525 = vmatpush2.msra.mxu0 %v281
    %526 = vmatprep.subr.mxu0 %v280
    %527 = vmatpush2.msra.mxu0 %v279
    %528 = vmatprep.mubr.f32.mxu0 %v174
    %529 = vmatmul.mubr.f32.gmra.mxu0 %v173
    %v530 = vpop.f32.mrf.mxu0
    %v531 = vadd.f32 %v454, %v530
    %v532 = vpop.f32.mrf.mxu0
    %v533 = vadd.f32 %v456, %v532
    %534 = vmatprep.mubr.f32.mxu0 %v180
    %535 = vmatmul.mubr.f32.gmra.mxu0 %v179
    %v536 = vpop.f32.mrf.mxu0
    %v537 = vadd.f32 %v460, %v536
    %v538 = vpop.f32.mrf.mxu0
    %v539 = vadd.f32 %v462, %v538
    %540 = vdwg.mxu0
    %541 = vmatprep.subr.mxu0 %v342
    %542 = vmatpush1.msra.mxu0 %v341
    %543 = vmatprep.subr.mxu0 %v340
    %544 = vmatpush1.msra.mxu0 %v339
    %545 = vmatprep.subr.mxu0 %v338
    %546 = vmatpush1.msra.mxu0 %v337
    %547 = vmatprep.subr.mxu0 %v336
    %548 = vmatpush1.msra.mxu0 %v335
    %549 = vmatprep.subr.mxu0 %v334
    %550 = vmatpush1.msra.mxu0 %v333
    %551 = vmatprep.subr.mxu0 %v332
    %552 = vmatpush1.msra.mxu0 %v331
    %553 = vmatprep.subr.mxu0 %v330
    %554 = vmatpush1.msra.mxu0 %v329
    %555 = vmatprep.subr.mxu0 %v328
    %556 = vmatpush1.msra.mxu0 %v327
    %557 = vmatprep.subr.mxu0 %v326
    %558 = vmatpush1.msra.mxu0 %v325
    %559 = vmatprep.subr.mxu0 %v324
    %560 = vmatpush1.msra.mxu0 %v323
    %561 = vmatprep.subr.mxu0 %v322
    %562 = vmatpush1.msra.mxu0 %v321
    %563 = vmatprep.subr.mxu0 %v320
    %564 = vmatpush1.msra.mxu0 %v319
    %565 = vmatprep.subr.mxu0 %v318
    %566 = vmatpush1.msra.mxu0 %v317
    %567 = vmatprep.subr.mxu0 %v316
    %568 = vmatpush1.msra.mxu0 %v315
    %569 = vmatprep.subr.mxu0 %v314
    %570 = vmatpush1.msra.mxu0 %v313
    %571 = vmatprep.subr.mxu0 %v312
    %572 = vmatpush1.msra.mxu0 %v311
    %573 = vmatprep.subr.mxu0 %v374
    %574 = vmatpush2.msra.mxu0 %v373
    %575 = vmatprep.subr.mxu0 %v372
    %576 = vmatpush2.msra.mxu0 %v371
    %577 = vmatprep.subr.mxu0 %v370
    %578 = vmatpush2.msra.mxu0 %v369
    %579 = vmatprep.subr.mxu0 %v368
    %580 = vmatpush2.msra.mxu0 %v367
    %581 = vmatprep.subr.mxu0 %v366
    %582 = vmatpush2.msra.mxu0 %v365
    %583 = vmatprep.subr.mxu0 %v364
    %584 = vmatpush2.msra.mxu0 %v363
    %585 = vmatprep.subr.mxu0 %v362
    %586 = vmatpush2.msra.mxu0 %v361
    %587 = vmatprep.subr.mxu0 %v360
    %588 = vmatpush2.msra.mxu0 %v359
    %589 = vmatprep.subr.mxu0 %v358
    %590 = vmatpush2.msra.mxu0 %v357
    %591 = vmatprep.subr.mxu0 %v356
    %592 = vmatpush2.msra.mxu0 %v355
    %593 = vmatprep.subr.mxu0 %v354
    %594 = vmatpush2.msra.mxu0 %v353
    %595 = vmatprep.subr.mxu0 %v352
    %596 = vmatpush2.msra.mxu0 %v351
    %597 = vmatprep.subr.mxu0 %v350
    %598 = vmatpush2.msra.mxu0 %v349
    %599 = vmatprep.subr.mxu0 %v348
    %600 = vmatpush2.msra.mxu0 %v347
    %601 = vmatprep.subr.mxu0 %v346
    %602 = vmatpush2.msra.mxu0 %v345
    %603 = vmatprep.subr.mxu0 %v344
    %604 = vmatpush2.msra.mxu0 %v343
    %605 = vmatprep.mubr.f32.mxu0 %v176
    %606 = vmatmul.mubr.f32.gmra.mxu0 %v175
    %v607 = vpop.f32.mrf.mxu0
    %v608 = vadd.f32 %v531, %v607
    %v609 = vpop.f32.mrf.mxu0
    %v610 = vadd.f32 %v533, %v609
    %611 = vmatprep.mubr.f32.mxu0 %v182
    %612 = vmatmul.mubr.f32.gmra.mxu0 %v181
    %v613 = vpop.f32.mrf.mxu0
    %v614 = vadd.f32 %v537, %v613
    %v615 = vpop.f32.mrf.mxu0
    %v616 = vadd.f32 %v539, %v615
    %617 = vdwg.mxu0
    %v618 = vmax.f32 %v608, 0.0
    %v619 = vmax.f32 %v610, 0.0
    %v620 = vmax.f32 %v614, 0.0
    %v621 = vmax.f32 %v616, 0.0
    %v622 = vld [vmem:[#allocation7] sm:$0xff]
    %v623 = vld [vmem:[#allocation7 + $0x8] sm:$0xff]
    %v624 = vld [vmem:[#allocation7 + $0x10] sm:$0xff]
    %v625 = vld [vmem:[#allocation7 + $0x18] sm:$0xff]
    %v626 = vld [vmem:[#allocation7 + $0x20] sm:$0xff]
    %v627 = vld [vmem:[#allocation7 + $0x28] sm:$0xff]
    %v628 = vld [vmem:[#allocation7 + $0x30] sm:$0xff]
    %v629 = vld [vmem:[#allocation7 + $0x38] sm:$0xff]
    %v630 = vld [vmem:[#allocation7 + $0x40] sm:$0xff]
    %v631 = vld [vmem:[#allocation7 + $0x48] sm:$0xff]
    %v632 = vld [vmem:[#allocation7 + $0x50] sm:$0xff]
    %v633 = vld [vmem:[#allocation7 + $0x58] sm:$0xff]
    %v634 = vld [vmem:[#allocation7 + $0x60] sm:$0xff]
    %v635 = vld [vmem:[#allocation7 + $0x68] sm:$0xff]
    %v636 = vld [vmem:[#allocation7 + $0x70] sm:$0xff]
    %v637 = vld [vmem:[#allocation7 + $0x78] sm:$0xff]
    %v638 = vld [vmem:[#allocation7 + $0x80] sm:$0xff]
    %v639 = vld [vmem:[#allocation7 + $0x88] sm:$0xff]
    %v640 = vld [vmem:[#allocation7 + $0x90] sm:$0xff]
    %v641 = vld [vmem:[#allocation7 + $0x98] sm:$0xff]
    %v642 = vld [vmem:[#allocation7 + $0xa0] sm:$0xff]
    %v643 = vld [vmem:[#allocation7 + $0xa8] sm:$0xff]
    %v644 = vld [vmem:[#allocation7 + $0xb0] sm:$0xff]
    %v645 = vld [vmem:[#allocation7 + $0xb8] sm:$0xff]
    %v646 = vld [vmem:[#allocation7 + $0xc0] sm:$0xff]
    %v647 = vld [vmem:[#allocation7 + $0xc8] sm:$0xff]
    %v648 = vld [vmem:[#allocation7 + $0xd0] sm:$0xff]
    %v649 = vld [vmem:[#allocation7 + $0xd8] sm:$0xff]
    %v650 = vld [vmem:[#allocation7 + $0xe0] sm:$0xff]
    %v651 = vld [vmem:[#allocation7 + $0xe8] sm:$0xff]
    %v652 = vld [vmem:[#allocation7 + $0xf0] sm:$0xff]
    %v653 = vld [vmem:[#allocation7 + $0xf8] sm:$0xff]
    %v654 = vld [vmem:[#allocation7 + $0x100] sm:$0xff]
    %v655 = vld [vmem:[#allocation7 + $0x108] sm:$0xff]
    %v656 = vld [vmem:[#allocation7 + $0x110] sm:$0xff]
    %v657 = vld [vmem:[#allocation7 + $0x118] sm:$0xff]
    %v658 = vld [vmem:[#allocation7 + $0x120] sm:$0xff]
    %v659 = vld [vmem:[#allocation7 + $0x128] sm:$0xff]
    %v660 = vld [vmem:[#allocation7 + $0x130] sm:$0xff]
    %v661 = vld [vmem:[#allocation7 + $0x138] sm:$0xff]
    %v662 = vld [vmem:[#allocation7 + $0x140] sm:$0xff]
    %v663 = vld [vmem:[#allocation7 + $0x148] sm:$0xff]
    %v664 = vld [vmem:[#allocation7 + $0x150] sm:$0xff]
    %v665 = vld [vmem:[#allocation7 + $0x158] sm:$0xff]
    %v666 = vld [vmem:[#allocation7 + $0x160] sm:$0xff]
    %v667 = vld [vmem:[#allocation7 + $0x168] sm:$0xff]
    %v668 = vld [vmem:[#allocation7 + $0x170] sm:$0xff]
    %v669 = vld [vmem:[#allocation7 + $0x178] sm:$0xff]
    %v670 = vld [vmem:[#allocation7 + $0x180] sm:$0xff]
    %v671 = vld [vmem:[#allocation7 + $0x188] sm:$0xff]
    %v672 = vld [vmem:[#allocation7 + $0x190] sm:$0xff]
    %v673 = vld [vmem:[#allocation7 + $0x198] sm:$0xff]
    %v674 = vld [vmem:[#allocation7 + $0x1a0] sm:$0xff]
    %v675 = vld [vmem:[#allocation7 + $0x1a8] sm:$0xff]
    %v676 = vld [vmem:[#allocation7 + $0x1b0] sm:$0xff]
    %v677 = vld [vmem:[#allocation7 + $0x1b8] sm:$0xff]
    %v678 = vld [vmem:[#allocation7 + $0x1c0] sm:$0xff]
    %v679 = vld [vmem:[#allocation7 + $0x1c8] sm:$0xff]
    %v680 = vld [vmem:[#allocation7 + $0x1d0] sm:$0xff]
    %v681 = vld [vmem:[#allocation7 + $0x1d8] sm:$0xff]
    %v682 = vld [vmem:[#allocation7 + $0x1e0] sm:$0xff]
    %v683 = vld [vmem:[#allocation7 + $0x1e8] sm:$0xff]
    %v684 = vld [vmem:[#allocation7 + $0x1f0] sm:$0xff]
    %v685 = vld [vmem:[#allocation7 + $0x1f8] sm:$0xff]
    %v686 = vld [vmem:[%s4] sm:$0x3]
    %v688 = vlaneseq
    %v689 = vshrl.u32 %v688, 7
    %v690 = vsub.s32 0, %v689
    %v691 = vrot.slane %v686, %v690
    %v692 = vlaneseq
    %v693 = vshrl.u32 %v692, 7
    %v694 = vsub.s32 1, %v693
    %v695 = vrot.slane %v686, %v694
    %698 = vmatprep.subr.mxu0 %v653
    %699 = vmatpush1.msra.mxu0 %v652
    %700 = vmatprep.subr.mxu0 %v651
    %701 = vmatpush1.msra.mxu0 %v650
    %702 = vmatprep.subr.mxu0 %v649
    %703 = vmatpush1.msra.mxu0 %v648
    %704 = vmatprep.subr.mxu0 %v647
    %705 = vmatpush1.msra.mxu0 %v646
    %706 = vmatprep.subr.mxu0 %v645
    %707 = vmatpush1.msra.mxu0 %v644
    %708 = vmatprep.subr.mxu0 %v643
    %709 = vmatpush1.msra.mxu0 %v642
    %710 = vmatprep.subr.mxu0 %v641
    %711 = vmatpush1.msra.mxu0 %v640
    %712 = vmatprep.subr.mxu0 %v639
    %713 = vmatpush1.msra.mxu0 %v638
    %714 = vmatprep.subr.mxu0 %v637
    %715 = vmatpush1.msra.mxu0 %v636
    %716 = vmatprep.subr.mxu0 %v635
    %717 = vmatpush1.msra.mxu0 %v634
    %718 = vmatprep.subr.mxu0 %v633
    %719 = vmatpush1.msra.mxu0 %v632
    %720 = vmatprep.subr.mxu0 %v631
    %721 = vmatpush1.msra.mxu0 %v630
    %722 = vmatprep.subr.mxu0 %v629
    %723 = vmatpush1.msra.mxu0 %v628
    %724 = vmatprep.subr.mxu0 %v627
    %725 = vmatpush1.msra.mxu0 %v626
    %726 = vmatprep.subr.mxu0 %v625
    %727 = vmatpush1.msra.mxu0 %v624
    %728 = vmatprep.subr.mxu0 %v623
    %729 = vmatpush1.msra.mxu0 %v622
    %730 = vmatprep.subr.mxu0 %v685
    %731 = vmatpush2.msra.mxu0 %v684
    %732 = vmatprep.subr.mxu0 %v683
    %733 = vmatpush2.msra.mxu0 %v682
    %734 = vmatprep.subr.mxu0 %v681
    %735 = vmatpush2.msra.mxu0 %v680
    %736 = vmatprep.subr.mxu0 %v679
    %737 = vmatpush2.msra.mxu0 %v678
    %738 = vmatprep.subr.mxu0 %v677
    %739 = vmatpush2.msra.mxu0 %v676
    %740 = vmatprep.subr.mxu0 %v675
    %741 = vmatpush2.msra.mxu0 %v674
    %742 = vmatprep.subr.mxu0 %v673
    %743 = vmatpush2.msra.mxu0 %v672
    %744 = vmatprep.subr.mxu0 %v671
    %745 = vmatpush2.msra.mxu0 %v670
    %746 = vmatprep.subr.mxu0 %v669
    %747 = vmatpush2.msra.mxu0 %v668
    %748 = vmatprep.subr.mxu0 %v667
    %749 = vmatpush2.msra.mxu0 %v666
    %750 = vmatprep.subr.mxu0 %v665
    %751 = vmatpush2.msra.mxu0 %v664
    %752 = vmatprep.subr.mxu0 %v663
    %753 = vmatpush2.msra.mxu0 %v662
    %754 = vmatprep.subr.mxu0 %v661
    %755 = vmatpush2.msra.mxu0 %v660
    %756 = vmatprep.subr.mxu0 %v659
    %757 = vmatpush2.msra.mxu0 %v658
    %758 = vmatprep.subr.mxu0 %v657
    %759 = vmatpush2.msra.mxu0 %v656
    %760 = vmatprep.subr.mxu0 %v655
    %761 = vmatpush2.msra.mxu0 %v654
    %762 = vmatprep.mubr.f32.mxu0 %v619
    %763 = vmatmul.mubr.f32.gmra.mxu0 %v618
    %v764 = vpop.f32.mrf.mxu0
    %v765 = vadd.f32 %v691, %v764
    %v766 = vpop.f32.mrf.mxu0
    %v767 = vadd.f32 %v695, %v766
    %768 = vmatprep.mubr.f32.mxu0 %v621
    %769 = vmatmul.mubr.f32.gmra.mxu0 %v620
    %v770 = vpop.f32.mrf.mxu0
    %v771 = vadd.f32 %v691, %v770
    %v772 = vpop.f32.mrf.mxu0
    %v773 = vadd.f32 %v695, %v772
    %774 = vdwg.mxu0
    %v775 = vtanh.pop %v765
    %v776 = vtanh.pop %v767
    %v777 = vtanh.pop %v771
    %v778 = vtanh.pop %v773
    %v779 = vld [vmem:[#allocation9] sm:$0xff]
    %v780 = vld [vmem:[#allocation9 + $0x8] sm:$0xff]
    %v781 = vld [vmem:[#allocation9 + $0x10] sm:$0xff]
    %v782 = vld [vmem:[#allocation9 + $0x18] sm:$0xff]
    %v783 = vld [vmem:[#allocation9 + $0x20] sm:$0xff]
    %v784 = vld [vmem:[#allocation9 + $0x28] sm:$0xff]
    %v785 = vld [vmem:[#allocation9 + $0x30] sm:$0xff]
    %v786 = vld [vmem:[#allocation9 + $0x38] sm:$0xff]
    %v787 = vld [vmem:[#allocation9 + $0x40] sm:$0xff]
    %v788 = vld [vmem:[#allocation9 + $0x48] sm:$0xff]
    %v789 = vld [vmem:[#allocation9 + $0x50] sm:$0xff]
    %v790 = vld [vmem:[#allocation9 + $0x58] sm:$0xff]
    %v791 = vld [vmem:[#allocation9 + $0x60] sm:$0xff]
    %v792 = vld [vmem:[#allocation9 + $0x68] sm:$0xff]
    %v793 = vld [vmem:[#allocation9 + $0x70] sm:$0xff]
    %v794 = vld [vmem:[#allocation9 + $0x78] sm:$0xff]
    %v795 = vld [vmem:[#allocation9 + $0x80] sm:$0xff]
    %v796 = vld [vmem:[#allocation9 + $0x88] sm:$0xff]
    %v797 = vld [vmem:[#allocation9 + $0x90] sm:$0xff]
    %v798 = vld [vmem:[#allocation9 + $0x98] sm:$0xff]
    %v799 = vld [vmem:[#allocation9 + $0xa0] sm:$0xff]
    %v800 = vld [vmem:[#allocation9 + $0xa8] sm:$0xff]
    %v801 = vld [vmem:[#allocation9 + $0xb0] sm:$0xff]
    %v802 = vld [vmem:[#allocation9 + $0xb8] sm:$0xff]
    %v803 = vld [vmem:[#allocation9 + $0xc0] sm:$0xff]
    %v804 = vld [vmem:[#allocation9 + $0xc8] sm:$0xff]
    %v805 = vld [vmem:[#allocation9 + $0xd0] sm:$0xff]
    %v806 = vld [vmem:[#allocation9 + $0xd8] sm:$0xff]
    %v807 = vld [vmem:[#allocation9 + $0xe0] sm:$0xff]
    %v808 = vld [vmem:[#allocation9 + $0xe8] sm:$0xff]
    %v809 = vld [vmem:[#allocation9 + $0xf0] sm:$0xff]
    %v810 = vld [vmem:[#allocation9 + $0xf8] sm:$0xff]
    %v811 = vld [vmem:[#allocation9 + $0x100] sm:$0xff]
    %v812 = vld [vmem:[#allocation9 + $0x108] sm:$0xff]
    %v813 = vld [vmem:[#allocation9 + $0x110] sm:$0xff]
    %v814 = vld [vmem:[#allocation9 + $0x118] sm:$0xff]
    %v815 = vld [vmem:[#allocation9 + $0x120] sm:$0xff]
    %v816 = vld [vmem:[#allocation9 + $0x128] sm:$0xff]
    %v817 = vld [vmem:[#allocation9 + $0x130] sm:$0xff]
    %v818 = vld [vmem:[#allocation9 + $0x138] sm:$0xff]
    %v819 = vld [vmem:[#allocation9 + $0x140] sm:$0xff]
    %v820 = vld [vmem:[#allocation9 + $0x148] sm:$0xff]
    %v821 = vld [vmem:[#allocation9 + $0x150] sm:$0xff]
    %v822 = vld [vmem:[#allocation9 + $0x158] sm:$0xff]
    %v823 = vld [vmem:[#allocation9 + $0x160] sm:$0xff]
    %v824 = vld [vmem:[#allocation9 + $0x168] sm:$0xff]
    %v825 = vld [vmem:[#allocation9 + $0x170] sm:$0xff]
    %v826 = vld [vmem:[#allocation9 + $0x178] sm:$0xff]
    %v827 = vld [vmem:[#allocation9 + $0x180] sm:$0xff]
    %v828 = vld [vmem:[#allocation9 + $0x188] sm:$0xff]
    %v829 = vld [vmem:[#allocation9 + $0x190] sm:$0xff]
    %v830 = vld [vmem:[#allocation9 + $0x198] sm:$0xff]
    %v831 = vld [vmem:[#allocation9 + $0x1a0] sm:$0xff]
    %v832 = vld [vmem:[#allocation9 + $0x1a8] sm:$0xff]
    %v833 = vld [vmem:[#allocation9 + $0x1b0] sm:$0xff]
    %v834 = vld [vmem:[#allocation9 + $0x1b8] sm:$0xff]
    %v835 = vld [vmem:[#allocation9 + $0x1c0] sm:$0xff]
    %v836 = vld [vmem:[#allocation9 + $0x1c8] sm:$0xff]
    %v837 = vld [vmem:[#allocation9 + $0x1d0] sm:$0xff]
    %v838 = vld [vmem:[#allocation9 + $0x1d8] sm:$0xff]
    %v839 = vld [vmem:[#allocation9 + $0x1e0] sm:$0xff]
    %v840 = vld [vmem:[#allocation9 + $0x1e8] sm:$0xff]
    %v841 = vld [vmem:[#allocation9 + $0x1f0] sm:$0xff]
    %v842 = vld [vmem:[#allocation9 + $0x1f8] sm:$0xff]
    %v843 = vld [vmem:[%s6] sm:$0x3]
    %v845 = vlaneseq
    %v846 = vshrl.u32 %v845, 7
    %v847 = vsub.s32 0, %v846
    %v848 = vrot.slane %v843, %v847
    %v849 = vlaneseq
    %v850 = vshrl.u32 %v849, 7
    %v851 = vsub.s32 1, %v850
    %v852 = vrot.slane %v843, %v851
    %855 = vmatprep.subr.mxu0 %v810
    %856 = vmatpush1.msra.mxu0 %v809
    %857 = vmatprep.subr.mxu0 %v808
    %858 = vmatpush1.msra.mxu0 %v807
    %859 = vmatprep.subr.mxu0 %v806
    %860 = vmatpush1.msra.mxu0 %v805
    %861 = vmatprep.subr.mxu0 %v804
    %862 = vmatpush1.msra.mxu0 %v803
    %863 = vmatprep.subr.mxu0 %v802
    %864 = vmatpush1.msra.mxu0 %v801
    %865 = vmatprep.subr.mxu0 %v800
    %866 = vmatpush1.msra.mxu0 %v799
    %867 = vmatprep.subr.mxu0 %v798
    %868 = vmatpush1.msra.mxu0 %v797
    %869 = vmatprep.subr.mxu0 %v796
    %870 = vmatpush1.msra.mxu0 %v795
    %871 = vmatprep.subr.mxu0 %v794
    %872 = vmatpush1.msra.mxu0 %v793
    %873 = vmatprep.subr.mxu0 %v792
    %874 = vmatpush1.msra.mxu0 %v791
    %875 = vmatprep.subr.mxu0 %v790
    %876 = vmatpush1.msra.mxu0 %v789
    %877 = vmatprep.subr.mxu0 %v788
    %878 = vmatpush1.msra.mxu0 %v787
    %879 = vmatprep.subr.mxu0 %v786
    %880 = vmatpush1.msra.mxu0 %v785
    %881 = vmatprep.subr.mxu0 %v784
    %882 = vmatpush1.msra.mxu0 %v783
    %883 = vmatprep.subr.mxu0 %v782
    %884 = vmatpush1.msra.mxu0 %v781
    %885 = vmatprep.subr.mxu0 %v780
    %886 = vmatpush1.msra.mxu0 %v779
    %887 = vmatprep.subr.mxu0 %v842
    %888 = vmatpush2.msra.mxu0 %v841
    %889 = vmatprep.subr.mxu0 %v840
    %890 = vmatpush2.msra.mxu0 %v839
    %891 = vmatprep.subr.mxu0 %v838
    %892 = vmatpush2.msra.mxu0 %v837
    %893 = vmatprep.subr.mxu0 %v836
    %894 = vmatpush2.msra.mxu0 %v835
    %895 = vmatprep.subr.mxu0 %v834
    %896 = vmatpush2.msra.mxu0 %v833
    %897 = vmatprep.subr.mxu0 %v832
    %898 = vmatpush2.msra.mxu0 %v831
    %899 = vmatprep.subr.mxu0 %v830
    %900 = vmatpush2.msra.mxu0 %v829
    %901 = vmatprep.subr.mxu0 %v828
    %902 = vmatpush2.msra.mxu0 %v827
    %903 = vmatprep.subr.mxu0 %v826
    %904 = vmatpush2.msra.mxu0 %v825
    %905 = vmatprep.subr.mxu0 %v824
    %906 = vmatpush2.msra.mxu0 %v823
    %907 = vmatprep.subr.mxu0 %v822
    %908 = vmatpush2.msra.mxu0 %v821
    %909 = vmatprep.subr.mxu0 %v820
    %910 = vmatpush2.msra.mxu0 %v819
    %911 = vmatprep.subr.mxu0 %v818
    %912 = vmatpush2.msra.mxu0 %v817
    %913 = vmatprep.subr.mxu0 %v816
    %914 = vmatpush2.msra.mxu0 %v815
    %915 = vmatprep.subr.mxu0 %v814
    %916 = vmatpush2.msra.mxu0 %v813
    %917 = vmatprep.subr.mxu0 %v812
    %918 = vmatpush2.msra.mxu0 %v811
    %919 = vmatprep.mubr.f32.mxu0 %v619
    %920 = vmatmul.mubr.f32.gmra.mxu0 %v618
    %v921 = vpop.f32.mrf.mxu0
    %v922 = vadd.f32 %v848, %v921
    %v923 = vpop.f32.mrf.mxu0
    %v924 = vadd.f32 %v852, %v923
    %925 = vmatprep.mubr.f32.mxu0 %v621
    %926 = vmatmul.mubr.f32.gmra.mxu0 %v620
    %v927 = vpop.f32.mrf.mxu0
    %v928 = vadd.f32 %v848, %v927
    %v929 = vpop.f32.mrf.mxu0
    %v930 = vadd.f32 %v852, %v929
    %931 = vdwg.mxu0
    %v932 = vxor.u32 %v922, 2147483648
    %v933 = vxor.u32 %v924, 2147483648
    %v934 = vxor.u32 %v928, 2147483648
    %v935 = vxor.u32 %v930, 2147483648
    %v936 = vmul.f32 %v932, 1.442695
    %v937 = vpow.pop %v936
    %v938 = vmul.f32 %v933, 1.442695
    %v939 = vpow.pop %v938
    %v940 = vmul.f32 %v934, 1.442695
    %v941 = vpow.pop %v940
    %v942 = vmul.f32 %v935, 1.442695
    %v943 = vpow.pop %v942
    %v944 = vadd.f32 %v937, 1.0
    %v945 = vadd.f32 %v939, 1.0
    %v946 = vadd.f32 %v941, 1.0
    %v947 = vadd.f32 %v943, 1.0
    %v948 = vrcp.pop %v944
    %v949 = vmul.f32 1.0, %v948
    %v950 = vrcp.pop %v945
    %v951 = vmul.f32 1.0, %v950
    %v952 = vrcp.pop %v946
    %v953 = vmul.f32 1.0, %v952
    %v954 = vrcp.pop %v947
    %v955 = vmul.f32 1.0, %v954
    %v956 = vmul.f32 %v775, %v949
    %v957 = vmul.f32 %v776, %v951
    %v958 = vmul.f32 %v777, %v953
    %v959 = vmul.f32 %v778, %v955
    %v960 = vld [vmem:[%s7] sm:$0x3]
    %v962 = vlaneseq
    %v963 = vshrl.u32 %v962, 7
    %v964 = vsub.s32 0, %v963
    %v965 = vrot.slane %v960, %v964
    %v966 = vlaneseq
    %v967 = vshrl.u32 %v966, 7
    %v968 = vsub.s32 1, %v967
    %v969 = vrot.slane %v960, %v968
    %v972 = vmul.f32 %v956, %v965
    %v973 = vmul.f32 %v957, %v969
    %v974 = vmul.f32 %v958, %v965
    %v975 = vmul.f32 %v959, %v969
    %v976 = vadd.f32 %v972, %v973
    %977 = vadd.xlane.f32.xlu0 %v976
    %v978 = vpop.xlane.xlu0 %977
    %v979 = vadd.f32 %v974, %v975
    %980 = vadd.xlane.f32.xlu0 %v979
    %v981 = vpop.xlane.xlu0 %980
    %v982 = vld [vmem:[#allocation2] sm:$0x1]
    %v984 = vlaneseq
    %v985 = vshrl.u32 %v984, 7
    %v986 = vsub.s32 0, %v985
    %v987 = vrot.slane %v982, %v986
    %v989 = vadd.f32 %v978, %v987
    %v990 = vadd.f32 %v981, %v987
    %vm991 = vcmask 7168
    %v992 = vsel %vm991, %v989, -inf
    %v993 = vrot.slane %v992, 4
    %v994 = vmax.f32 %v992, %v993
    %v995 = vrot.slane %v994, 2
    %v996 = vmax.f32 %v994, %v995
    %v997 = vrot.slane %v996, 1
    %v998 = vmax.f32 %v996, %v997
    %v999 = vsel %vm991, %v990, -inf
    %v1000 = vrot.slane %v999, 4
    %v1001 = vmax.f32 %v999, %v1000
    %v1002 = vrot.slane %v1001, 2
    %v1003 = vmax.f32 %v1001, %v1002
    %v1004 = vrot.slane %v1003, 1
    %v1005 = vmax.f32 %v1003, %v1004
    %v1006 = vsub.f32 %v989, %v998
    %v1007 = vsub.f32 %v990, %v1005
    %v1008 = vmul.f32 %v1006, 1.442695
    %v1009 = vpow.pop %v1008
    %v1010 = vmul.f32 %v1007, 1.442695
    %v1011 = vpow.pop %v1010
    %v1012 = vsel %vm991, %v1009, 0.0
    %v1013 = vrot.slane %v1012, 4
    %v1014 = vadd.f32 %v1012, %v1013
    %v1015 = vrot.slane %v1014, 2
    %v1016 = vadd.f32 %v1014, %v1015
    %v1017 = vrot.slane %v1016, 1
    %v1018 = vadd.f32 %v1016, %v1017
    %v1019 = vsel %vm991, %v1011, 0.0
    %v1020 = vrot.slane %v1019, 4
    %v1021 = vadd.f32 %v1019, %v1020
    %v1022 = vrot.slane %v1021, 2
    %v1023 = vadd.f32 %v1021, %v1022
    %v1024 = vrot.slane %v1023, 1
    %v1025 = vadd.f32 %v1023, %v1024
    %v1026 = vrcp.pop %v1018
    %v1027 = vmul.f32 %v1009, %v1026
    %v1028 = vrcp.pop %v1025
    %v1029 = vmul.f32 %v1011, %v1028
    %1031 = vset.pattern.permute.xlu0 0
    %1032 = vperm.xlu0 %1031, %v1027
    %v1033 = vpop.permute.xlu0 %1032
    %1036 = vset.pattern.permute.xlu0 0
    %1037 = vperm.xlu0 %1036, %v1029
    %v1038 = vpop.permute.xlu0 %1037
    %v1040 = vmul.f32 %v1033, %v618
    %v1041 = vmul.f32 %v1033, %v619
    %v1042 = vmul.f32 %v1038, %v620
    %v1043 = vmul.f32 %v1038, %v621
    %v1044 = vrot.slane %v1040, 4
    %v1045 = vadd.f32 %v1040, %v1044
    %v1046 = vrot.slane %v1045, 2
    %v1047 = vadd.f32 %v1045, %v1046
    %v1048 = vrot.slane %v1047, 1
    %v1049 = vadd.f32 %v1047, %v1048
    %v1050 = vrot.slane %v1041, 4
    %v1051 = vadd.f32 %v1041, %v1050
    %v1052 = vrot.slane %v1051, 2
    %v1053 = vadd.f32 %v1051, %v1052
    %v1054 = vrot.slane %v1053, 1
    %v1055 = vadd.f32 %v1053, %v1054
    %v1056 = vrot.slane %v1042, 4
    %v1057 = vadd.f32 %v1042, %v1056
    %v1058 = vrot.slane %v1057, 2
    %v1059 = vadd.f32 %v1057, %v1058
    %v1060 = vrot.slane %v1059, 1
    %v1061 = vadd.f32 %v1059, %v1060
    %v1062 = vrot.slane %v1043, 4
    %v1063 = vadd.f32 %v1043, %v1062
    %v1064 = vrot.slane %v1063, 2
    %v1065 = vadd.f32 %v1063, %v1064
    %v1066 = vrot.slane %v1065, 1
    %v1067 = vadd.f32 %v1065, %v1066
    %v1068 = vld [vmem:[#allocation10] sm:$0xff]
    %v1069 = vld [vmem:[#allocation10 + $0x8] sm:$0xff]
    %v1070 = vld [vmem:[#allocation10 + $0x10] sm:$0xff]
    %v1071 = vld [vmem:[#allocation10 + $0x18] sm:$0xff]
    %v1072 = vld [vmem:[#allocation10 + $0x20] sm:$0xff]
    %v1073 = vld [vmem:[#allocation10 + $0x28] sm:$0xff]
    %v1074 = vld [vmem:[#allocation10 + $0x30] sm:$0xff]
    %v1075 = vld [vmem:[#allocation10 + $0x38] sm:$0xff]
    %v1076 = vld [vmem:[#allocation10 + $0x40] sm:$0xff]
    %v1077 = vld [vmem:[#allocation10 + $0x48] sm:$0xff]
    %v1078 = vld [vmem:[#allocation10 + $0x50] sm:$0xff]
    %v1079 = vld [vmem:[#allocation10 + $0x58] sm:$0xff]
    %v1080 = vld [vmem:[#allocation10 + $0x60] sm:$0xff]
    %v1081 = vld [vmem:[#allocation10 + $0x68] sm:$0xff]
    %v1082 = vld [vmem:[#allocation10 + $0x70] sm:$0xff]
    %v1083 = vld [vmem:[#allocation10 + $0x78] sm:$0xff]
    %v1084 = vld [vmem:[#allocation10 + $0x80] sm:$0xff]
    %v1085 = vld [vmem:[#allocation10 + $0x88] sm:$0xff]
    %v1086 = vld [vmem:[#allocation10 + $0x90] sm:$0xff]
    %v1087 = vld [vmem:[#allocation10 + $0x98] sm:$0xff]
    %v1088 = vld [vmem:[#allocation10 + $0xa0] sm:$0xff]
    %v1089 = vld [vmem:[#allocation10 + $0xa8] sm:$0xff]
    %v1090 = vld [vmem:[#allocation10 + $0xb0] sm:$0xff]
    %v1091 = vld [vmem:[#allocation10 + $0xb8] sm:$0xff]
    %v1092 = vld [vmem:[#allocation10 + $0xc0] sm:$0xff]
    %v1093 = vld [vmem:[#allocation10 + $0xc8] sm:$0xff]
    %v1094 = vld [vmem:[#allocation10 + $0xd0] sm:$0xff]
    %v1095 = vld [vmem:[#allocation10 + $0xd8] sm:$0xff]
    %v1096 = vld [vmem:[#allocation10 + $0xe0] sm:$0xff]
    %v1097 = vld [vmem:[#allocation10 + $0xe8] sm:$0xff]
    %v1098 = vld [vmem:[#allocation10 + $0xf0] sm:$0xff]
    %v1099 = vld [vmem:[#allocation10 + $0xf8] sm:$0xff]
    %v1100 = vld [vmem:[#allocation10 + $0x100] sm:$0xff]
    %v1101 = vld [vmem:[#allocation10 + $0x108] sm:$0xff]
    %v1102 = vld [vmem:[#allocation10 + $0x110] sm:$0xff]
    %v1103 = vld [vmem:[#allocation10 + $0x118] sm:$0xff]
    %v1104 = vld [vmem:[#allocation10 + $0x120] sm:$0xff]
    %v1105 = vld [vmem:[#allocation10 + $0x128] sm:$0xff]
    %v1106 = vld [vmem:[#allocation10 + $0x130] sm:$0xff]
    %v1107 = vld [vmem:[#allocation10 + $0x138] sm:$0xff]
    %v1108 = vld [vmem:[#allocation10 + $0x140] sm:$0xff]
    %v1109 = vld [vmem:[#allocation10 + $0x148] sm:$0xff]
    %v1110 = vld [vmem:[#allocation10 + $0x150] sm:$0xff]
    %v1111 = vld [vmem:[#allocation10 + $0x158] sm:$0xff]
    %v1112 = vld [vmem:[#allocation10 + $0x160] sm:$0xff]
    %v1113 = vld [vmem:[#allocation10 + $0x168] sm:$0xff]
    %v1114 = vld [vmem:[#allocation10 + $0x170] sm:$0xff]
    %v1115 = vld [vmem:[#allocation10 + $0x178] sm:$0xff]
    %v1116 = vld [vmem:[#allocation10 + $0x180] sm:$0xff]
    %v1117 = vld [vmem:[#allocation10 + $0x188] sm:$0xff]
    %v1118 = vld [vmem:[#allocation10 + $0x190] sm:$0xff]
    %v1119 = vld [vmem:[#allocation10 + $0x198] sm:$0xff]
    %v1120 = vld [vmem:[#allocation10 + $0x1a0] sm:$0xff]
    %v1121 = vld [vmem:[#allocation10 + $0x1a8] sm:$0xff]
    %v1122 = vld [vmem:[#allocation10 + $0x1b0] sm:$0xff]
    %v1123 = vld [vmem:[#allocation10 + $0x1b8] sm:$0xff]
    %v1124 = vld [vmem:[#allocation10 + $0x1c0] sm:$0xff]
    %v1125 = vld [vmem:[#allocation10 + $0x1c8] sm:$0xff]
    %v1126 = vld [vmem:[#allocation10 + $0x1d0] sm:$0xff]
    %v1127 = vld [vmem:[#allocation10 + $0x1d8] sm:$0xff]
    %v1128 = vld [vmem:[#allocation10 + $0x1e0] sm:$0xff]
    %v1129 = vld [vmem:[#allocation10 + $0x1e8] sm:$0xff]
    %v1130 = vld [vmem:[#allocation10 + $0x1f0] sm:$0xff]
    %v1131 = vld [vmem:[#allocation10 + $0x1f8] sm:$0xff]
    %v1132 = vld [vmem:[%s10] sm:$0x3]
    %v1134 = vlaneseq
    %v1135 = vshrl.u32 %v1134, 7
    %v1136 = vsub.s32 0, %v1135
    %v1137 = vrot.slane %v1132, %v1136
    %v1138 = vlaneseq
    %v1139 = vshrl.u32 %v1138, 7
    %v1140 = vsub.s32 1, %v1139
    %v1141 = vrot.slane %v1132, %v1140
    %vm1148 = vcmask 1041409
    %v1149 = vsel %vm1148, %v1061, %v1049
    %v1150 = vsel %vm1148, %v1067, %v1055
    %1153 = vmatprep.subr.mxu0 %v1099
    %1154 = vmatpush1.msra.mxu0 %v1098
    %1155 = vmatprep.subr.mxu0 %v1097
    %1156 = vmatpush1.msra.mxu0 %v1096
    %1157 = vmatprep.subr.mxu0 %v1095
    %1158 = vmatpush1.msra.mxu0 %v1094
    %1159 = vmatprep.subr.mxu0 %v1093
    %1160 = vmatpush1.msra.mxu0 %v1092
    %1161 = vmatprep.subr.mxu0 %v1091
    %1162 = vmatpush1.msra.mxu0 %v1090
    %1163 = vmatprep.subr.mxu0 %v1089
    %1164 = vmatpush1.msra.mxu0 %v1088
    %1165 = vmatprep.subr.mxu0 %v1087
    %1166 = vmatpush1.msra.mxu0 %v1086
    %1167 = vmatprep.subr.mxu0 %v1085
    %1168 = vmatpush1.msra.mxu0 %v1084
    %1169 = vmatprep.subr.mxu0 %v1083
    %1170 = vmatpush1.msra.mxu0 %v1082
    %1171 = vmatprep.subr.mxu0 %v1081
    %1172 = vmatpush1.msra.mxu0 %v1080
    %1173 = vmatprep.subr.mxu0 %v1079
    %1174 = vmatpush1.msra.mxu0 %v1078
    %1175 = vmatprep.subr.mxu0 %v1077
    %1176 = vmatpush1.msra.mxu0 %v1076
    %1177 = vmatprep.subr.mxu0 %v1075
    %1178 = vmatpush1.msra.mxu0 %v1074
    %1179 = vmatprep.subr.mxu0 %v1073
    %1180 = vmatpush1.msra.mxu0 %v1072
    %1181 = vmatprep.subr.mxu0 %v1071
    %1182 = vmatpush1.msra.mxu0 %v1070
    %1183 = vmatprep.subr.mxu0 %v1069
    %1184 = vmatpush1.msra.mxu0 %v1068
    %1185 = vmatprep.subr.mxu0 %v1131
    %1186 = vmatpush2.msra.mxu0 %v1130
    %1187 = vmatprep.subr.mxu0 %v1129
    %1188 = vmatpush2.msra.mxu0 %v1128
    %1189 = vmatprep.subr.mxu0 %v1127
    %1190 = vmatpush2.msra.mxu0 %v1126
    %1191 = vmatprep.subr.mxu0 %v1125
    %1192 = vmatpush2.msra.mxu0 %v1124
    %1193 = vmatprep.subr.mxu0 %v1123
    %1194 = vmatpush2.msra.mxu0 %v1122
    %1195 = vmatprep.subr.mxu0 %v1121
    %1196 = vmatpush2.msra.mxu0 %v1120
    %1197 = vmatprep.subr.mxu0 %v1119
    %1198 = vmatpush2.msra.mxu0 %v1118
    %1199 = vmatprep.subr.mxu0 %v1117
    %1200 = vmatpush2.msra.mxu0 %v1116
    %1201 = vmatprep.subr.mxu0 %v1115
    %1202 = vmatpush2.msra.mxu0 %v1114
    %1203 = vmatprep.subr.mxu0 %v1113
    %1204 = vmatpush2.msra.mxu0 %v1112
    %1205 = vmatprep.subr.mxu0 %v1111
    %1206 = vmatpush2.msra.mxu0 %v1110
    %1207 = vmatprep.subr.mxu0 %v1109
    %1208 = vmatpush2.msra.mxu0 %v1108
    %1209 = vmatprep.subr.mxu0 %v1107
    %1210 = vmatpush2.msra.mxu0 %v1106
    %1211 = vmatprep.subr.mxu0 %v1105
    %1212 = vmatpush2.msra.mxu0 %v1104
    %1213 = vmatprep.subr.mxu0 %v1103
    %1214 = vmatpush2.msra.mxu0 %v1102
    %1215 = vmatprep.subr.mxu0 %v1101
    %1216 = vmatpush2.msra.mxu0 %v1100
    %1217 = vmatprep.mubr.f32.mxu0 %v1150
    %1218 = vmatmul.mubr.f32.gmra.mxu0 %v1149
    %v1219 = vpop.f32.mrf.mxu0
    %v1220 = vadd.f32 %v1137, %v1219
    %v1221 = vpop.f32.mrf.mxu0
    %v1222 = vadd.f32 %v1141, %v1221
    %1223 = vdwg.mxu0
    %v1224 = vmax.f32 %v1220, 0.0
    %v1225 = vmax.f32 %v1222, 0.0
    %v1226 = vld [vmem:[#allocation12] sm:$0xff]
    %v1227 = vld [vmem:[#allocation12 + $0x8] sm:$0xff]
    %v1228 = vld [vmem:[#allocation12 + $0x10] sm:$0xff]
    %v1229 = vld [vmem:[#allocation12 + $0x18] sm:$0xff]
    %v1230 = vld [vmem:[#allocation12 + $0x20] sm:$0xff]
    %v1231 = vld [vmem:[#allocation12 + $0x28] sm:$0xff]
    %v1232 = vld [vmem:[#allocation12 + $0x30] sm:$0xff]
    %v1233 = vld [vmem:[#allocation12 + $0x38] sm:$0xff]
    %v1234 = vld [vmem:[#allocation12 + $0x40] sm:$0xff]
    %v1235 = vld [vmem:[#allocation12 + $0x48] sm:$0xff]
    %v1236 = vld [vmem:[#allocation12 + $0x50] sm:$0xff]
    %v1237 = vld [vmem:[#allocation12 + $0x58] sm:$0xff]
    %v1238 = vld [vmem:[#allocation12 + $0x60] sm:$0xff]
    %v1239 = vld [vmem:[#allocation12 + $0x68] sm:$0xff]
    %v1240 = vld [vmem:[#allocation12 + $0x70] sm:$0xff]
    %v1241 = vld [vmem:[#allocation12 + $0x78] sm:$0xff]
    %v1242 = vld [vmem:[#allocation12 + $0x80] sm:$0xff]
    %v1243 = vld [vmem:[#allocation12 + $0x88] sm:$0xff]
    %v1244 = vld [vmem:[#allocation12 + $0x90] sm:$0xff]
    %v1245 = vld [vmem:[#allocation12 + $0x98] sm:$0xff]
    %v1246 = vld [vmem:[#allocation12 + $0xa0] sm:$0xff]
    %v1247 = vld [vmem:[#allocation12 + $0xa8] sm:$0xff]
    %v1248 = vld [vmem:[#allocation12 + $0xb0] sm:$0xff]
    %v1249 = vld [vmem:[#allocation12 + $0xb8] sm:$0xff]
    %v1250 = vld [vmem:[#allocation12 + $0xc0] sm:$0xff]
    %v1251 = vld [vmem:[#allocation12 + $0xc8] sm:$0xff]
    %v1252 = vld [vmem:[#allocation12 + $0xd0] sm:$0xff]
    %v1253 = vld [vmem:[#allocation12 + $0xd8] sm:$0xff]
    %v1254 = vld [vmem:[#allocation12 + $0xe0] sm:$0xff]
    %v1255 = vld [vmem:[#allocation12 + $0xe8] sm:$0xff]
    %v1256 = vld [vmem:[#allocation12 + $0xf0] sm:$0xff]
    %v1257 = vld [vmem:[#allocation12 + $0xf8] sm:$0xff]
    %v1258 = vld [vmem:[#allocation12 + $0x100] sm:$0xff]
    %v1259 = vld [vmem:[#allocation12 + $0x108] sm:$0xff]
    %v1260 = vld [vmem:[#allocation12 + $0x110] sm:$0xff]
    %v1261 = vld [vmem:[#allocation12 + $0x118] sm:$0xff]
    %v1262 = vld [vmem:[#allocation12 + $0x120] sm:$0xff]
    %v1263 = vld [vmem:[#allocation12 + $0x128] sm:$0xff]
    %v1264 = vld [vmem:[#allocation12 + $0x130] sm:$0xff]
    %v1265 = vld [vmem:[#allocation12 + $0x138] sm:$0xff]
    %v1266 = vld [vmem:[#allocation12 + $0x140] sm:$0xff]
    %v1267 = vld [vmem:[#allocation12 + $0x148] sm:$0xff]
    %v1268 = vld [vmem:[#allocation12 + $0x150] sm:$0xff]
    %v1269 = vld [vmem:[#allocation12 + $0x158] sm:$0xff]
    %v1270 = vld [vmem:[#allocation12 + $0x160] sm:$0xff]
    %v1271 = vld [vmem:[#allocation12 + $0x168] sm:$0xff]
    %v1272 = vld [vmem:[#allocation12 + $0x170] sm:$0xff]
    %v1273 = vld [vmem:[#allocation12 + $0x178] sm:$0xff]
    %v1274 = vld [vmem:[#allocation12 + $0x180] sm:$0xff]
    %v1275 = vld [vmem:[#allocation12 + $0x188] sm:$0xff]
    %v1276 = vld [vmem:[#allocation12 + $0x190] sm:$0xff]
    %v1277 = vld [vmem:[#allocation12 + $0x198] sm:$0xff]
    %v1278 = vld [vmem:[#allocation12 + $0x1a0] sm:$0xff]
    %v1279 = vld [vmem:[#allocation12 + $0x1a8] sm:$0xff]
    %v1280 = vld [vmem:[#allocation12 + $0x1b0] sm:$0xff]
    %v1281 = vld [vmem:[#allocation12 + $0x1b8] sm:$0xff]
    %v1282 = vld [vmem:[#allocation12 + $0x1c0] sm:$0xff]
    %v1283 = vld [vmem:[#allocation12 + $0x1c8] sm:$0xff]
    %v1284 = vld [vmem:[#allocation12 + $0x1d0] sm:$0xff]
    %v1285 = vld [vmem:[#allocation12 + $0x1d8] sm:$0xff]
    %v1286 = vld [vmem:[#allocation12 + $0x1e0] sm:$0xff]
    %v1287 = vld [vmem:[#allocation12 + $0x1e8] sm:$0xff]
    %v1288 = vld [vmem:[#allocation12 + $0x1f0] sm:$0xff]
    %v1289 = vld [vmem:[#allocation12 + $0x1f8] sm:$0xff]
    %v1290 = vld [vmem:[%s12] sm:$0x3]
    %v1292 = vlaneseq
    %v1293 = vshrl.u32 %v1292, 7
    %v1294 = vsub.s32 0, %v1293
    %v1295 = vrot.slane %v1290, %v1294
    %v1296 = vlaneseq
    %v1297 = vshrl.u32 %v1296, 7
    %v1298 = vsub.s32 1, %v1297
    %v1299 = vrot.slane %v1290, %v1298
    %1302 = vmatprep.subr.mxu0 %v1257
    %1303 = vmatpush1.msra.mxu0 %v1256
    %1304 = vmatprep.subr.mxu0 %v1255
    %1305 = vmatpush1.msra.mxu0 %v1254
    %1306 = vmatprep.subr.mxu0 %v1253
    %1307 = vmatpush1.msra.mxu0 %v1252
    %1308 = vmatprep.subr.mxu0 %v1251
    %1309 = vmatpush1.msra.mxu0 %v1250
    %1310 = vmatprep.subr.mxu0 %v1249
    %1311 = vmatpush1.msra.mxu0 %v1248
    %1312 = vmatprep.subr.mxu0 %v1247
    %1313 = vmatpush1.msra.mxu0 %v1246
    %1314 = vmatprep.subr.mxu0 %v1245
    %1315 = vmatpush1.msra.mxu0 %v1244
    %1316 = vmatprep.subr.mxu0 %v1243
    %1317 = vmatpush1.msra.mxu0 %v1242
    %1318 = vmatprep.subr.mxu0 %v1241
    %1319 = vmatpush1.msra.mxu0 %v1240
    %1320 = vmatprep.subr.mxu0 %v1239
    %1321 = vmatpush1.msra.mxu0 %v1238
    %1322 = vmatprep.subr.mxu0 %v1237
    %1323 = vmatpush1.msra.mxu0 %v1236
    %1324 = vmatprep.subr.mxu0 %v1235
    %1325 = vmatpush1.msra.mxu0 %v1234
    %1326 = vmatprep.subr.mxu0 %v1233
    %1327 = vmatpush1.msra.mxu0 %v1232
    %1328 = vmatprep.subr.mxu0 %v1231
    %1329 = vmatpush1.msra.mxu0 %v1230
    %1330 = vmatprep.subr.mxu0 %v1229
    %1331 = vmatpush1.msra.mxu0 %v1228
    %1332 = vmatprep.subr.mxu0 %v1227
    %1333 = vmatpush1.msra.mxu0 %v1226
    %1334 = vmatprep.subr.mxu0 %v1289
    %1335 = vmatpush2.msra.mxu0 %v1288
    %1336 = vmatprep.subr.mxu0 %v1287
    %1337 = vmatpush2.msra.mxu0 %v1286
    %1338 = vmatprep.subr.mxu0 %v1285
    %1339 = vmatpush2.msra.mxu0 %v1284
    %1340 = vmatprep.subr.mxu0 %v1283
    %1341 = vmatpush2.msra.mxu0 %v1282
    %1342 = vmatprep.subr.mxu0 %v1281
    %1343 = vmatpush2.msra.mxu0 %v1280
    %1344 = vmatprep.subr.mxu0 %v1279
    %1345 = vmatpush2.msra.mxu0 %v1278
    %1346 = vmatprep.subr.mxu0 %v1277
    %1347 = vmatpush2.msra.mxu0 %v1276
    %1348 = vmatprep.subr.mxu0 %v1275
    %1349 = vmatpush2.msra.mxu0 %v1274
    %1350 = vmatprep.subr.mxu0 %v1273
    %1351 = vmatpush2.msra.mxu0 %v1272
    %1352 = vmatprep.subr.mxu0 %v1271
    %1353 = vmatpush2.msra.mxu0 %v1270
    %1354 = vmatprep.subr.mxu0 %v1269
    %1355 = vmatpush2.msra.mxu0 %v1268
    %1356 = vmatprep.subr.mxu0 %v1267
    %1357 = vmatpush2.msra.mxu0 %v1266
    %1358 = vmatprep.subr.mxu0 %v1265
    %1359 = vmatpush2.msra.mxu0 %v1264
    %1360 = vmatprep.subr.mxu0 %v1263
    %1361 = vmatpush2.msra.mxu0 %v1262
    %1362 = vmatprep.subr.mxu0 %v1261
    %1363 = vmatpush2.msra.mxu0 %v1260
    %1364 = vmatprep.subr.mxu0 %v1259
    %1365 = vmatpush2.msra.mxu0 %v1258
    %1366 = vmatprep.mubr.f32.mxu0 %v1225
    %1367 = vmatmul.mubr.f32.gmra.mxu0 %v1224
    %v1368 = vpop.f32.mrf.mxu0
    %v1369 = vadd.f32 %v1295, %v1368
    %v1370 = vpop.f32.mrf.mxu0
    %v1371 = vadd.f32 %v1299, %v1370
    %1372 = vdwg.mxu0
    %v1373 = vtanh.pop %v1369
    %v1374 = vtanh.pop %v1371
    %v1375 = vld [vmem:[#allocation13] sm:$0xff]
    %v1376 = vld [vmem:[#allocation13 + $0x8] sm:$0xff]
    %v1377 = vld [vmem:[#allocation13 + $0x10] sm:$0xff]
    %v1378 = vld [vmem:[#allocation13 + $0x18] sm:$0xff]
    %v1379 = vld [vmem:[#allocation13 + $0x20] sm:$0xff]
    %v1380 = vld [vmem:[#allocation13 + $0x28] sm:$0xff]
    %v1381 = vld [vmem:[#allocation13 + $0x30] sm:$0xff]
    %v1382 = vld [vmem:[#allocation13 + $0x38] sm:$0xff]
    %v1383 = vld [vmem:[#allocation13 + $0x40] sm:$0xff]
    %v1384 = vld [vmem:[#allocation13 + $0x48] sm:$0xff]
    %v1385 = vld [vmem:[#allocation13 + $0x50] sm:$0xff]
    %v1386 = vld [vmem:[#allocation13 + $0x58] sm:$0xff]
    %v1387 = vld [vmem:[#allocation13 + $0x60] sm:$0xff]
    %v1388 = vld [vmem:[#allocation13 + $0x68] sm:$0xff]
    %v1389 = vld [vmem:[#allocation13 + $0x70] sm:$0xff]
    %v1390 = vld [vmem:[#allocation13 + $0x78] sm:$0xff]
    %v1391 = vld [vmem:[#allocation13 + $0x80] sm:$0xff]
    %v1392 = vld [vmem:[#allocation13 + $0x88] sm:$0xff]
    %v1393 = vld [vmem:[#allocation13 + $0x90] sm:$0xff]
    %v1394 = vld [vmem:[#allocation13 + $0x98] sm:$0xff]
    %v1395 = vld [vmem:[#allocation13 + $0xa0] sm:$0xff]
    %v1396 = vld [vmem:[#allocation13 + $0xa8] sm:$0xff]
    %v1397 = vld [vmem:[#allocation13 + $0xb0] sm:$0xff]
    %v1398 = vld [vmem:[#allocation13 + $0xb8] sm:$0xff]
    %v1399 = vld [vmem:[#allocation13 + $0xc0] sm:$0xff]
    %v1400 = vld [vmem:[#allocation13 + $0xc8] sm:$0xff]
    %v1401 = vld [vmem:[#allocation13 + $0xd0] sm:$0xff]
    %v1402 = vld [vmem:[#allocation13 + $0xd8] sm:$0xff]
    %v1403 = vld [vmem:[#allocation13 + $0xe0] sm:$0xff]
    %v1404 = vld [vmem:[#allocation13 + $0xe8] sm:$0xff]
    %v1405 = vld [vmem:[#allocation13 + $0xf0] sm:$0xff]
    %v1406 = vld [vmem:[#allocation13 + $0xf8] sm:$0xff]
    %v1407 = vld [vmem:[#allocation13 + $0x100] sm:$0xff]
    %v1408 = vld [vmem:[#allocation13 + $0x108] sm:$0xff]
    %v1409 = vld [vmem:[#allocation13 + $0x110] sm:$0xff]
    %v1410 = vld [vmem:[#allocation13 + $0x118] sm:$0xff]
    %v1411 = vld [vmem:[#allocation13 + $0x120] sm:$0xff]
    %v1412 = vld [vmem:[#allocation13 + $0x128] sm:$0xff]
    %v1413 = vld [vmem:[#allocation13 + $0x130] sm:$0xff]
    %v1414 = vld [vmem:[#allocation13 + $0x138] sm:$0xff]
    %v1415 = vld [vmem:[#allocation13 + $0x140] sm:$0xff]
    %v1416 = vld [vmem:[#allocation13 + $0x148] sm:$0xff]
    %v1417 = vld [vmem:[#allocation13 + $0x150] sm:$0xff]
    %v1418 = vld [vmem:[#allocation13 + $0x158] sm:$0xff]
    %v1419 = vld [vmem:[#allocation13 + $0x160] sm:$0xff]
    %v1420 = vld [vmem:[#allocation13 + $0x168] sm:$0xff]
    %v1421 = vld [vmem:[#allocation13 + $0x170] sm:$0xff]
    %v1422 = vld [vmem:[#allocation13 + $0x178] sm:$0xff]
    %v1423 = vld [vmem:[#allocation13 + $0x180] sm:$0xff]
    %v1424 = vld [vmem:[#allocation13 + $0x188] sm:$0xff]
    %v1425 = vld [vmem:[#allocation13 + $0x190] sm:$0xff]
    %v1426 = vld [vmem:[#allocation13 + $0x198] sm:$0xff]
    %v1427 = vld [vmem:[#allocation13 + $0x1a0] sm:$0xff]
    %v1428 = vld [vmem:[#allocation13 + $0x1a8] sm:$0xff]
    %v1429 = vld [vmem:[#allocation13 + $0x1b0] sm:$0xff]
    %v1430 = vld [vmem:[#allocation13 + $0x1b8] sm:$0xff]
    %v1431 = vld [vmem:[#allocation13 + $0x1c0] sm:$0xff]
    %v1432 = vld [vmem:[#allocation13 + $0x1c8] sm:$0xff]
    %v1433 = vld [vmem:[#allocation13 + $0x1d0] sm:$0xff]
    %v1434 = vld [vmem:[#allocation13 + $0x1d8] sm:$0xff]
    %v1435 = vld [vmem:[#allocation13 + $0x1e0] sm:$0xff]
    %v1436 = vld [vmem:[#allocation13 + $0x1e8] sm:$0xff]
    %v1437 = vld [vmem:[#allocation13 + $0x1f0] sm:$0xff]
    %v1438 = vld [vmem:[#allocation13 + $0x1f8] sm:$0xff]
    %v1439 = vld [vmem:[%s14] sm:$0x3]
    %v1441 = vlaneseq
    %v1442 = vshrl.u32 %v1441, 7
    %v1443 = vsub.s32 0, %v1442
    %v1444 = vrot.slane %v1439, %v1443
    %v1445 = vlaneseq
    %v1446 = vshrl.u32 %v1445, 7
    %v1447 = vsub.s32 1, %v1446
    %v1448 = vrot.slane %v1439, %v1447
    %1451 = vmatprep.subr.mxu0 %v1406
    %1452 = vmatpush1.msra.mxu0 %v1405
    %1453 = vmatprep.subr.mxu0 %v1404
    %1454 = vmatpush1.msra.mxu0 %v1403
    %1455 = vmatprep.subr.mxu0 %v1402
    %1456 = vmatpush1.msra.mxu0 %v1401
    %1457 = vmatprep.subr.mxu0 %v1400
    %1458 = vmatpush1.msra.mxu0 %v1399
    %1459 = vmatprep.subr.mxu0 %v1398
    %1460 = vmatpush1.msra.mxu0 %v1397
    %1461 = vmatprep.subr.mxu0 %v1396
    %1462 = vmatpush1.msra.mxu0 %v1395
    %1463 = vmatprep.subr.mxu0 %v1394
    %1464 = vmatpush1.msra.mxu0 %v1393
    %1465 = vmatprep.subr.mxu0 %v1392
    %1466 = vmatpush1.msra.mxu0 %v1391
    %1467 = vmatprep.subr.mxu0 %v1390
    %1468 = vmatpush1.msra.mxu0 %v1389
    %1469 = vmatprep.subr.mxu0 %v1388
    %1470 = vmatpush1.msra.mxu0 %v1387
    %1471 = vmatprep.subr.mxu0 %v1386
    %1472 = vmatpush1.msra.mxu0 %v1385
    %1473 = vmatprep.subr.mxu0 %v1384
    %1474 = vmatpush1.msra.mxu0 %v1383
    %1475 = vmatprep.subr.mxu0 %v1382
    %1476 = vmatpush1.msra.mxu0 %v1381
    %1477 = vmatprep.subr.mxu0 %v1380
    %1478 = vmatpush1.msra.mxu0 %v1379
    %1479 = vmatprep.subr.mxu0 %v1378
    %1480 = vmatpush1.msra.mxu0 %v1377
    %1481 = vmatprep.subr.mxu0 %v1376
    %1482 = vmatpush1.msra.mxu0 %v1375
    %1483 = vmatprep.subr.mxu0 %v1438
    %1484 = vmatpush2.msra.mxu0 %v1437
    %1485 = vmatprep.subr.mxu0 %v1436
    %1486 = vmatpush2.msra.mxu0 %v1435
    %1487 = vmatprep.subr.mxu0 %v1434
    %1488 = vmatpush2.msra.mxu0 %v1433
    %1489 = vmatprep.subr.mxu0 %v1432
    %1490 = vmatpush2.msra.mxu0 %v1431
    %1491 = vmatprep.subr.mxu0 %v1430
    %1492 = vmatpush2.msra.mxu0 %v1429
    %1493 = vmatprep.subr.mxu0 %v1428
    %1494 = vmatpush2.msra.mxu0 %v1427
    %1495 = vmatprep.subr.mxu0 %v1426
    %1496 = vmatpush2.msra.mxu0 %v1425
    %1497 = vmatprep.subr.mxu0 %v1424
    %1498 = vmatpush2.msra.mxu0 %v1423
    %1499 = vmatprep.subr.mxu0 %v1422
    %1500 = vmatpush2.msra.mxu0 %v1421
    %1501 = vmatprep.subr.mxu0 %v1420
    %1502 = vmatpush2.msra.mxu0 %v1419
    %1503 = vmatprep.subr.mxu0 %v1418
    %1504 = vmatpush2.msra.mxu0 %v1417
    %1505 = vmatprep.subr.mxu0 %v1416
    %1506 = vmatpush2.msra.mxu0 %v1415
    %1507 = vmatprep.subr.mxu0 %v1414
    %1508 = vmatpush2.msra.mxu0 %v1413
    %1509 = vmatprep.subr.mxu0 %v1412
    %1510 = vmatpush2.msra.mxu0 %v1411
    %1511 = vmatprep.subr.mxu0 %v1410
    %1512 = vmatpush2.msra.mxu0 %v1409
    %1513 = vmatprep.subr.mxu0 %v1408
    %1514 = vmatpush2.msra.mxu0 %v1407
    %1515 = vmatprep.mubr.f32.mxu0 %v1225
    %1516 = vmatmul.mubr.f32.gmra.mxu0 %v1224
    %v1517 = vpop.f32.mrf.mxu0
    %v1518 = vadd.f32 %v1444, %v1517
    %v1519 = vpop.f32.mrf.mxu0
    %v1520 = vadd.f32 %v1448, %v1519
    %1521 = vdwg.mxu0
    %v1522 = vxor.u32 %v1518, 2147483648
    %v1523 = vxor.u32 %v1520, 2147483648
    %v1524 = vmul.f32 %v1522, 1.442695
    %v1525 = vpow.pop %v1524
    %v1526 = vmul.f32 %v1523, 1.442695
    %v1527 = vpow.pop %v1526
    %v1528 = vadd.f32 %v1525, 1.0
    %v1529 = vadd.f32 %v1527, 1.0
    %v1530 = vrcp.pop %v1528
    %v1531 = vmul.f32 1.0, %v1530
    %v1532 = vrcp.pop %v1529
    %v1533 = vmul.f32 1.0, %v1532
    %v1534 = vmul.f32 %v1373, %v1531
    %v1535 = vmul.f32 %v1374, %v1533
    %v1536 = vld [vmem:[%s15] sm:$0x3]
    %v1538 = vlaneseq
    %v1539 = vshrl.u32 %v1538, 7
    %v1540 = vsub.s32 0, %v1539
    %v1541 = vrot.slane %v1536, %v1540
    %v1542 = vlaneseq
    %v1543 = vshrl.u32 %v1542, 7
    %v1544 = vsub.s32 1, %v1543
    %v1545 = vrot.slane %v1536, %v1544
    %v1548 = vmul.f32 %v1534, %v1541
    %v1549 = vmul.f32 %v1535, %v1545
    %vm1550 = vcmask 1041408
    %v1551 = vsel %vm1550, %v1548, 0.0
    %v1552 = vsel %vm1550, %v1549, 0.0
    %v1553 = vadd.f32 %v1551, %v1552
    %1554 = vadd.xlane.f32.xlu0 %v1553
    %v1555 = vpop.xlane.xlu0 %1554
    %v1556 = vld [vmem:[#allocation3] sm:$0x1]
    %v1558 = vlaneseq
    %v1559 = vshrl.u32 %v1558, 7
    %v1560 = vsub.s32 0, %v1559
    %v1561 = vrot.slane %v1556, %v1560
    %v1563 = vadd.f32 %v1555, %v1561
    %vm1564 = vcmask 1024
    %v1565 = vsel %vm1564, %v1563, -inf
    %v1566 = vrot.slane %v1565, 4
    %v1567 = vmax.f32 %v1565, %v1566
    %v1568 = vrot.slane %v1567, 2
    %v1569 = vmax.f32 %v1567, %v1568
    %v1570 = vrot.slane %v1569, 1
    %v1571 = vmax.f32 %v1569, %v1570
    %v1572 = vsub.f32 %v1563, %v1571
    %v1573 = vmul.f32 %v1572, 1.442695
    %v1574 = vpow.pop %v1573
    %v1575 = vsel %vm1564, %v1574, 0.0
    %v1576 = vrot.slane %v1575, 4
    %v1577 = vadd.f32 %v1575, %v1576
    %v1578 = vrot.slane %v1577, 2
    %v1579 = vadd.f32 %v1577, %v1578
    %v1580 = vrot.slane %v1579, 1
    %v1581 = vadd.f32 %v1579, %v1580
    %v1582 = vrcp.pop %v1581
    %v1583 = vmul.f32 %v1574, %v1582
    %1585 = vset.pattern.permute.xlu0 0
    %1586 = vperm.xlu0 %1585, %v1583
    %v1587 = vpop.permute.xlu0 %1586
    %v1589 = vmul.f32 %v1587, %v1224
    %v1590 = vmul.f32 %v1587, %v1225
    %v1591 = vsel %vm1550, %v1589, 0.0
    %v1592 = vrot.slane %v1591, 4
    %v1593 = vadd.f32 %v1591, %v1592
    %v1594 = vrot.slane %v1593, 2
    %v1595 = vadd.f32 %v1593, %v1594
    %v1596 = vrot.slane %v1595, 1
    %v1597 = vadd.f32 %v1595, %v1596
    %v1598 = vsel %vm1550, %v1590, 0.0
    %v1599 = vrot.slane %v1598, 4
    %v1600 = vadd.f32 %v1598, %v1599
    %v1601 = vrot.slane %v1600, 2
    %v1602 = vadd.f32 %v1600, %v1601
    %v1603 = vrot.slane %v1602, 1
    %v1604 = vadd.f32 %v1602, %v1603
    %v1605 = vld [vmem:[#allocation15] sm:$0xff]
    %v1606 = vld [vmem:[#allocation15 + $0x8] sm:$0xff]
    %v1607 = vld [vmem:[#allocation15 + $0x10] sm:$0xff]
    %v1608 = vld [vmem:[#allocation15 + $0x18] sm:$0xff]
    %v1609 = vld [vmem:[#allocation15 + $0x20] sm:$0xff]
    %v1610 = vld [vmem:[#allocation15 + $0x28] sm:$0xff]
    %v1611 = vld [vmem:[#allocation15 + $0x30] sm:$0xff]
    %v1612 = vld [vmem:[#allocation15 + $0x38] sm:$0xff]
    %v1613 = vld [vmem:[#allocation15 + $0x40] sm:$0xff]
    %v1614 = vld [vmem:[#allocation15 + $0x48] sm:$0xff]
    %v1615 = vld [vmem:[#allocation15 + $0x50] sm:$0xff]
    %v1616 = vld [vmem:[#allocation15 + $0x58] sm:$0xff]
    %v1617 = vld [vmem:[#allocation15 + $0x60] sm:$0xff]
    %v1618 = vld [vmem:[#allocation15 + $0x68] sm:$0xff]
    %v1619 = vld [vmem:[#allocation15 + $0x70] sm:$0xff]
    %v1620 = vld [vmem:[#allocation15 + $0x78] sm:$0xff]
    %v1621 = vld [vmem:[#allocation15 + $0x80] sm:$0xff]
    %v1622 = vld [vmem:[#allocation15 + $0x88] sm:$0xff]
    %v1623 = vld [vmem:[#allocation15 + $0x90] sm:$0xff]
    %v1624 = vld [vmem:[#allocation15 + $0x98] sm:$0xff]
    %v1625 = vld [vmem:[#allocation15 + $0xa0] sm:$0xff]
    %v1626 = vld [vmem:[#allocation15 + $0xa8] sm:$0xff]
    %v1627 = vld [vmem:[#allocation15 + $0xb0] sm:$0xff]
    %v1628 = vld [vmem:[#allocation15 + $0xb8] sm:$0xff]
    %v1629 = vld [vmem:[#allocation15 + $0xc0] sm:$0xff]
    %v1630 = vld [vmem:[#allocation15 + $0xc8] sm:$0xff]
    %v1631 = vld [vmem:[#allocation15 + $0xd0] sm:$0xff]
    %v1632 = vld [vmem:[#allocation15 + $0xd8] sm:$0xff]
    %v1633 = vld [vmem:[#allocation15 + $0xe0] sm:$0xff]
    %v1634 = vld [vmem:[#allocation15 + $0xe8] sm:$0xff]
    %v1635 = vld [vmem:[#allocation15 + $0xf0] sm:$0xff]
    %v1636 = vld [vmem:[#allocation15 + $0xf8] sm:$0xff]
    %v1637 = vld [vmem:[#allocation15 + $0x100] sm:$0xff]
    %v1638 = vld [vmem:[#allocation15 + $0x108] sm:$0xff]
    %v1639 = vld [vmem:[#allocation15 + $0x110] sm:$0xff]
    %v1640 = vld [vmem:[#allocation15 + $0x118] sm:$0xff]
    %v1641 = vld [vmem:[#allocation15 + $0x120] sm:$0xff]
    %v1642 = vld [vmem:[#allocation15 + $0x128] sm:$0xff]
    %v1643 = vld [vmem:[#allocation15 + $0x130] sm:$0xff]
    %v1644 = vld [vmem:[#allocation15 + $0x138] sm:$0xff]
    %v1645 = vld [vmem:[#allocation15 + $0x140] sm:$0xff]
    %v1646 = vld [vmem:[#allocation15 + $0x148] sm:$0xff]
    %v1647 = vld [vmem:[#allocation15 + $0x150] sm:$0xff]
    %v1648 = vld [vmem:[#allocation15 + $0x158] sm:$0xff]
    %v1649 = vld [vmem:[#allocation15 + $0x160] sm:$0xff]
    %v1650 = vld [vmem:[#allocation15 + $0x168] sm:$0xff]
    %v1651 = vld [vmem:[#allocation15 + $0x170] sm:$0xff]
    %v1652 = vld [vmem:[#allocation15 + $0x178] sm:$0xff]
    %v1653 = vld [vmem:[#allocation15 + $0x180] sm:$0xff]
    %v1654 = vld [vmem:[#allocation15 + $0x188] sm:$0xff]
    %v1655 = vld [vmem:[#allocation15 + $0x190] sm:$0xff]
    %v1656 = vld [vmem:[#allocation15 + $0x198] sm:$0xff]
    %v1657 = vld [vmem:[#allocation15 + $0x1a0] sm:$0xff]
    %v1658 = vld [vmem:[#allocation15 + $0x1a8] sm:$0xff]
    %v1659 = vld [vmem:[#allocation15 + $0x1b0] sm:$0xff]
    %v1660 = vld [vmem:[#allocation15 + $0x1b8] sm:$0xff]
    %v1661 = vld [vmem:[#allocation15 + $0x1c0] sm:$0xff]
    %v1662 = vld [vmem:[#allocation15 + $0x1c8] sm:$0xff]
    %v1663 = vld [vmem:[#allocation15 + $0x1d0] sm:$0xff]
    %v1664 = vld [vmem:[#allocation15 + $0x1d8] sm:$0xff]
    %v1665 = vld [vmem:[#allocation15 + $0x1e0] sm:$0xff]
    %v1666 = vld [vmem:[#allocation15 + $0x1e8] sm:$0xff]
    %v1667 = vld [vmem:[#allocation15 + $0x1f0] sm:$0xff]
    %v1668 = vld [vmem:[#allocation15 + $0x1f8] sm:$0xff]
    %v1669 = vld [vmem:[%s18] sm:$0x3]
    %v1671 = vlaneseq
    %v1672 = vshrl.u32 %v1671, 7
    %v1673 = vsub.s32 0, %v1672
    %v1674 = vrot.slane %v1669, %v1673
    %v1675 = vlaneseq
    %v1676 = vshrl.u32 %v1675, 7
    %v1677 = vsub.s32 1, %v1676
    %v1678 = vrot.slane %v1669, %v1677
    %1681 = vmatprep.subr.mxu0 %v1636
    %1682 = vmatpush1.msra.mxu0 %v1635
    %1683 = vmatprep.subr.mxu0 %v1634
    %1684 = vmatpush1.msra.mxu0 %v1633
    %1685 = vmatprep.subr.mxu0 %v1632
    %1686 = vmatpush1.msra.mxu0 %v1631
    %1687 = vmatprep.subr.mxu0 %v1630
    %1688 = vmatpush1.msra.mxu0 %v1629
    %1689 = vmatprep.subr.mxu0 %v1628
    %1690 = vmatpush1.msra.mxu0 %v1627
    %1691 = vmatprep.subr.mxu0 %v1626
    %1692 = vmatpush1.msra.mxu0 %v1625
    %1693 = vmatprep.subr.mxu0 %v1624
    %1694 = vmatpush1.msra.mxu0 %v1623
    %1695 = vmatprep.subr.mxu0 %v1622
    %1696 = vmatpush1.msra.mxu0 %v1621
    %1697 = vmatprep.subr.mxu0 %v1620
    %1698 = vmatpush1.msra.mxu0 %v1619
    %1699 = vmatprep.subr.mxu0 %v1618
    %1700 = vmatpush1.msra.mxu0 %v1617
    %1701 = vmatprep.subr.mxu0 %v1616
    %1702 = vmatpush1.msra.mxu0 %v1615
    %1703 = vmatprep.subr.mxu0 %v1614
    %1704 = vmatpush1.msra.mxu0 %v1613
    %1705 = vmatprep.subr.mxu0 %v1612
    %1706 = vmatpush1.msra.mxu0 %v1611
    %1707 = vmatprep.subr.mxu0 %v1610
    %1708 = vmatpush1.msra.mxu0 %v1609
    %1709 = vmatprep.subr.mxu0 %v1608
    %1710 = vmatpush1.msra.mxu0 %v1607
    %1711 = vmatprep.subr.mxu0 %v1606
    %1712 = vmatpush1.msra.mxu0 %v1605
    %1713 = vmatprep.subr.mxu0 %v1668
    %1714 = vmatpush2.msra.mxu0 %v1667
    %1715 = vmatprep.subr.mxu0 %v1666
    %1716 = vmatpush2.msra.mxu0 %v1665
    %1717 = vmatprep.subr.mxu0 %v1664
    %1718 = vmatpush2.msra.mxu0 %v1663
    %1719 = vmatprep.subr.mxu0 %v1662
    %1720 = vmatpush2.msra.mxu0 %v1661
    %1721 = vmatprep.subr.mxu0 %v1660
    %1722 = vmatpush2.msra.mxu0 %v1659
    %1723 = vmatprep.subr.mxu0 %v1658
    %1724 = vmatpush2.msra.mxu0 %v1657
    %1725 = vmatprep.subr.mxu0 %v1656
    %1726 = vmatpush2.msra.mxu0 %v1655
    %1727 = vmatprep.subr.mxu0 %v1654
    %1728 = vmatpush2.msra.mxu0 %v1653
    %1729 = vmatprep.subr.mxu0 %v1652
    %1730 = vmatpush2.msra.mxu0 %v1651
    %1731 = vmatprep.subr.mxu0 %v1650
    %1732 = vmatpush2.msra.mxu0 %v1649
    %1733 = vmatprep.subr.mxu0 %v1648
    %1734 = vmatpush2.msra.mxu0 %v1647
    %1735 = vmatprep.subr.mxu0 %v1646
    %1736 = vmatpush2.msra.mxu0 %v1645
    %1737 = vmatprep.subr.mxu0 %v1644
    %1738 = vmatpush2.msra.mxu0 %v1643
    %1739 = vmatprep.subr.mxu0 %v1642
    %1740 = vmatpush2.msra.mxu0 %v1641
    %1741 = vmatprep.subr.mxu0 %v1640
    %1742 = vmatpush2.msra.mxu0 %v1639
    %1743 = vmatprep.subr.mxu0 %v1638
    %1744 = vmatpush2.msra.mxu0 %v1637
    %1745 = vmatprep.mubr.f32.mxu0 %v1604
    %1746 = vmatmul.mubr.f32.gmra.mxu0 %v1597
    %v1747 = vpop.f32.mrf.mxu0
    %v1748 = vadd.f32 %v1674, %v1747
    %v1749 = vpop.f32.mrf.mxu0
    %v1750 = vadd.f32 %v1678, %v1749
    %1751 = vdwg.mxu0
    %v1752 = vmax.f32 %v1748, 0.0
    %v1753 = vmax.f32 %v1750, 0.0
    %v1754 = vld [vmem:[%s19] sm:$0xff]
    %v1755 = vld [vmem:[%s19 + $0x8] sm:$0xff]
    %v1756 = vld [vmem:[%s19 + $0x10] sm:$0xff]
    %v1757 = vld [vmem:[%s19 + $0x18] sm:$0xff]
    %v1758 = vld [vmem:[%s19 + $0x20] sm:$0xff]
    %v1759 = vld [vmem:[%s19 + $0x28] sm:$0xff]
    %v1760 = vld [vmem:[%s19 + $0x30] sm:$0xff]
    %v1761 = vld [vmem:[%s19 + $0x38] sm:$0xff]
    %v1762 = vld [vmem:[%s19 + $0x40] sm:$0xff]
    %v1763 = vld [vmem:[%s19 + $0x48] sm:$0xff]
    %v1764 = vld [vmem:[%s19 + $0x50] sm:$0xff]
    %v1765 = vld [vmem:[%s19 + $0x58] sm:$0xff]
    %v1766 = vld [vmem:[%s19 + $0x60] sm:$0xff]
    %v1767 = vld [vmem:[%s19 + $0x68] sm:$0xff]
    %v1768 = vld [vmem:[%s19 + $0x70] sm:$0xff]
    %v1769 = vld [vmem:[%s19 + $0x78] sm:$0xff]
    %v1770 = vld [vmem:[%s19 + $0x80] sm:$0xff]
    %v1771 = vld [vmem:[%s19 + $0x88] sm:$0xff]
    %v1772 = vld [vmem:[%s19 + $0x90] sm:$0xff]
    %v1773 = vld [vmem:[%s19 + $0x98] sm:$0xff]
    %v1774 = vld [vmem:[%s19 + $0xa0] sm:$0xff]
    %v1775 = vld [vmem:[%s19 + $0xa8] sm:$0xff]
    %v1776 = vld [vmem:[%s19 + $0xb0] sm:$0xff]
    %v1777 = vld [vmem:[%s19 + $0xb8] sm:$0xff]
    %v1778 = vld [vmem:[%s19 + $0xc0] sm:$0xff]
    %v1779 = vld [vmem:[%s19 + $0xc8] sm:$0xff]
    %v1780 = vld [vmem:[%s19 + $0xd0] sm:$0xff]
    %v1781 = vld [vmem:[%s19 + $0xd8] sm:$0xff]
    %v1782 = vld [vmem:[%s19 + $0xe0] sm:$0xff]
    %v1783 = vld [vmem:[%s19 + $0xe8] sm:$0xff]
    %v1784 = vld [vmem:[%s19 + $0xf0] sm:$0xff]
    %v1785 = vld [vmem:[%s19 + $0xf8] sm:$0xff]
    %v1786 = vld [vmem:[%s20] sm:$0x1]
    %1787 = vmatprep.subr.mxu0 0.0
    %1788 = vmatpush1.msra.mxu0 %v1769
    %1789 = vmatprep.subr.mxu0 0.0
    %1790 = vmatpush1.msra.mxu0 %v1768
    %1791 = vmatprep.subr.mxu0 0.0
    %1792 = vmatpush1.msra.mxu0 %v1767
    %1793 = vmatprep.subr.mxu0 0.0
    %1794 = vmatpush1.msra.mxu0 %v1766
    %1795 = vmatprep.subr.mxu0 0.0
    %1796 = vmatpush1.msra.mxu0 %v1765
    %1797 = vmatprep.subr.mxu0 0.0
    %1798 = vmatpush1.msra.mxu0 %v1764
    %1799 = vmatprep.subr.mxu0 0.0
    %1800 = vmatpush1.msra.mxu0 %v1763
    %1801 = vmatprep.subr.mxu0 0.0
    %1802 = vmatpush1.msra.mxu0 %v1762
    %1803 = vmatprep.subr.mxu0 0.0
    %1804 = vmatpush1.msra.mxu0 %v1761
    %1805 = vmatprep.subr.mxu0 0.0
    %1806 = vmatpush1.msra.mxu0 %v1760
    %1807 = vmatprep.subr.mxu0 0.0
    %1808 = vmatpush1.msra.mxu0 %v1759
    %1809 = vmatprep.subr.mxu0 0.0
    %1810 = vmatpush1.msra.mxu0 %v1758
    %1811 = vmatprep.subr.mxu0 0.0
    %1812 = vmatpush1.msra.mxu0 %v1757
    %1813 = vmatprep.subr.mxu0 0.0
    %1814 = vmatpush1.msra.mxu0 %v1756
    %1815 = vmatprep.subr.mxu0 0.0
    %1816 = vmatpush1.msra.mxu0 %v1755
    %1817 = vmatprep.subr.mxu0 0.0
    %1818 = vmatpush1.msra.mxu0 %v1754
    %1819 = vmatprep.subr.mxu0 0.0
    %1820 = vmatpush2.msra.mxu0 %v1785
    %1821 = vmatprep.subr.mxu0 0.0
    %1822 = vmatpush2.msra.mxu0 %v1784
    %1823 = vmatprep.subr.mxu0 0.0
    %1824 = vmatpush2.msra.mxu0 %v1783
    %1825 = vmatprep.subr.mxu0 0.0
    %1826 = vmatpush2.msra.mxu0 %v1782
    %1827 = vmatprep.subr.mxu0 0.0
    %1828 = vmatpush2.msra.mxu0 %v1781
    %1829 = vmatprep.subr.mxu0 0.0
    %1830 = vmatpush2.msra.mxu0 %v1780
    %1831 = vmatprep.subr.mxu0 0.0
    %1832 = vmatpush2.msra.mxu0 %v1779
    %1833 = vmatprep.subr.mxu0 0.0
    %1834 = vmatpush2.msra.mxu0 %v1778
    %1835 = vmatprep.subr.mxu0 0.0
    %1836 = vmatpush2.msra.mxu0 %v1777
    %1837 = vmatprep.subr.mxu0 0.0
    %1838 = vmatpush2.msra.mxu0 %v1776
    %1839 = vmatprep.subr.mxu0 0.0
    %1840 = vmatpush2.msra.mxu0 %v1775
    %1841 = vmatprep.subr.mxu0 0.0
    %1842 = vmatpush2.msra.mxu0 %v1774
    %1843 = vmatprep.subr.mxu0 0.0
    %1844 = vmatpush2.msra.mxu0 %v1773
    %1845 = vmatprep.subr.mxu0 0.0
    %1846 = vmatpush2.msra.mxu0 %v1772
    %1847 = vmatprep.subr.mxu0 0.0
    %1848 = vmatpush2.msra.mxu0 %v1771
    %1849 = vmatprep.subr.mxu0 0.0
    %1850 = vmatpush2.msra.mxu0 %v1770
    %1851 = vmatprep.mubr.f32.mxu0 %v1753
    %1852 = vmatmul.mubr.f32.gmra.mxu0 %v1752
    %v1853 = vpop.f32.mrf.mxu0
    %v1854 = vadd.f32 %v1786, %v1853
    %v1855 = vpop.f32.mrf.mxu0
    %1856 = vdwg.mxu0
    %vm1857 = vcmask 8192
    %1858 = vst.msk [vmem:[#allocation16] sm:$0x1] %vm1857, %v1854
    %v1859 = vsel %vm1857, %v1854, -inf
    %1860 = vmax.xlane.f32.xlu0 %v1859
    %v1861 = vpop.xlane.xlu0 %1860
    %v1862 = vsub.f32 %v1854, %v1861
    %v1863 = vmul.f32 %v1862, 1.442695
    %v1864 = vpow.pop %v1863
    %v1865 = vsel %vm1857, %v1864, 0.0
    %1866 = vadd.xlane.f32.xlu0 %v1865
    %v1867 = vpop.xlane.xlu0 %1866
    %v1868 = vrcp.pop %v1867
    %v1869 = vmul.f32 %v1864, %v1868
    %1870 = vst.msk [vmem:[#allocation17] sm:$0x1] %vm1857, %v1869
    // Predicated region
    $region114: #{tpu_custom_call.1} parent=1 // pred_check
      _
    $region115: #{tpu_custom_call.1} parent=1 // pred_check_branch
      %1872 = sbr.rel (0) target = $region117
    $region116: #{tpu_custom_call.1} parent=1 // pred_region
      %s1874 = ssub.s32 16, 16
      %1875 = vsyncadd [#allocation6], %s1874
      %s1877 = sshll.u32 [#allocation16], 4
      %s1878 = int_to_ptr.vmem [resolvable:$true] %s1877
      %1880 = dma.vmem_to_hbm [thread:$0]  %s1878, 16, %s21, [#allocation6]
    $region117: #{tpu_custom_call.1} parent=1 // pred_fallthru
      _
    // Predicated region
    $region118: #{tpu_custom_call.1} parent=1 // pred_check
      _
    $region119: #{tpu_custom_call.1} parent=1 // pred_check_branch
      %1882 = sbr.rel (0) target = $region121
    $region120: #{tpu_custom_call.1} parent=1 // pred_region
      %s1884 = ssub.s32 16, 16
      %1885 = vsyncadd [#allocation18], %s1884
      %s1887 = sshll.u32 [#allocation17], 4
      %s1888 = int_to_ptr.vmem [resolvable:$true] %s1887
      %1890 = dma.vmem_to_hbm [thread:$0]  %s1888, 16, %s22, [#allocation18]
    $region121: #{tpu_custom_call.1} parent=1 // pred_fallthru
      _
    // Predicated region
    $region122: #{tpu_custom_call.1} parent=1 // pred_check
      _
    $region123: #{tpu_custom_call.1} parent=1 // pred_check_branch
      %1892 = sbr.rel (0) target = $region125
    $region124: #{tpu_custom_call.1} parent=1 // pred_region
      %1893 = dma.done [#allocation6], 16
    $region125: #{tpu_custom_call.1} parent=1 // pred_fallthru
      _
    // Predicated region
    $region126: #{tpu_custom_call.1} parent=1 // pred_check
      _
    $region127: #{tpu_custom_call.1} parent=1 // pred_check_branch
      %1895 = sbr.rel (0) target = $region129
    $region128: #{tpu_custom_call.1} parent=1 // pred_region
      %1896 = dma.done [#allocation18], 16
    $region129: #{tpu_custom_call.1} parent=1 // pred_fallthru
      _
    %1897 = vsyncpa [#allocation5], 1
    %1898 = vsyncpa [#allocation8], 1
    %1899 = vsyncpa [#allocation11], 1
    %1900 = vsyncpa [#allocation14], 1
    %1901 = vsyncpa [#allocation6], 1
    %1902 = vsyncpa [#allocation18], 1

</llo_original>
